<compile_context>
chip_gen: v6e
topology: v6e:2x2x1
jax: 0.10.0
libtpu: 0.0.40
codegen_flags: <defaults>
</compile_context>

<pallas_src>
import jax
import jax.numpy as jnp
from jax.experimental import pallas as pl
from jax.experimental.pallas import tpu as pltpu

# ----------------------------- config ---------------------------------------
B       = 2
C       = 3
IMG     = 16
PATCH   = 8
D       = 32            # hidden_size
H       = 2             # num_attention_heads
HD      = D // H        # head_dim
FF      = 64            # intermediate_size
LAYERS  = 2             # num_hidden_layers
EPS     = 1e-6          # layer_norm_eps
NP      = (IMG // PATCH) ** 2     # num patches per image = 4
CPP     = C * PATCH * PATCH       # flattened patch size = 192
BNP     = B * NP                  # packed rows = 8

_GELU_C = 0.7978845608028654      # sqrt(2/pi)
BF16    = jnp.bfloat16


# --------------------------- in-kernel helpers -------------------------------
def _layer_norm(x, w, b):
    # f32 in / f32 out (VPU/EUP path kept in f32 for v5e compatibility).
    mu = jnp.mean(x, axis=-1, keepdims=True)
    var = jnp.mean((x - mu) ** 2, axis=-1, keepdims=True)
    return (x - mu) * jax.lax.rsqrt(var + EPS) * w + b


def _gelu_tanh(x):
    # gelu_pytorch_tanh, f32
    return 0.5 * x * (1.0 + jnp.tanh(_GELU_C * (x + 0.044715 * x * x * x)))


# ------------------------------ fused kernel ---------------------------------
def fused_vit_kernel(patches_ref, pw_ref, posb_ref, bias_ref,
                     ln1w_ref, ln1b_ref, qkvw_ref, qkvb_ref, ow_ref, ob_ref,
                     ln2w_ref, ln2b_ref, f1w_ref, f1b_ref, f2w_ref, f2b_ref,
                     normw_ref, normb_ref, o_ref):
    attn_bias = bias_ref[...]                                        # (BNP, BNP) f32

    # ---- patch + position embedding (conv bias pre-folded into posb) ----
    # bf16 operands on the MXU, f32 accumulation.
    x = jnp.dot(patches_ref[...], pw_ref[...],
                preferred_element_type=jnp.float32) + posb_ref[...]  # (BNP, D) f32

    for l in range(LAYERS):                      # static unroll (LAYERS = 2)
        # ---- self-attention block ----
        h = _layer_norm(x, ln1w_ref[l], ln1b_ref[l])                 # f32
        qkv = jnp.dot(h.astype(BF16), qkvw_ref[l],
                      preferred_element_type=jnp.float32) + qkvb_ref[l]  # (BNP, 3D) f32

        ctx_heads = []
        for hh in range(H):                      # static unroll over heads
            lo = hh * HD
            # softmax scale is pre-folded into the Q columns of qkv_w/qkv_b
            q_h = qkv[:, lo:lo + HD].astype(BF16)
            k_h = qkv[:, D + lo:D + lo + HD].astype(BF16)
            v_h = qkv[:, 2 * D + lo:2 * D + lo + HD].astype(BF16)
            s = jax.lax.dot_general(q_h, k_h, (((1,), (1,)), ((), ())),
                                    preferred_element_type=jnp.float32)  # (BNP,BNP) f32
            s = s + attn_bias                    # block-diag mask, f32
            s = s - jnp.max(s, axis=-1, keepdims=True)
            e = jnp.exp(s)
            p = e * pl.reciprocal(jnp.sum(e, axis=-1, keepdims=True), approx=True)
            ctx_heads.append(jnp.dot(p.astype(BF16), v_h,
                                     preferred_element_type=jnp.float32))  # (BNP, HD)

        # Pack both heads and do ONE (BNP, D) @ (D, D) output projection.
        ctx = jnp.concatenate(ctx_heads, axis=-1).astype(BF16)       # (BNP, D)
        x = x + jnp.dot(ctx, ow_ref[l],
                        preferred_element_type=jnp.float32) + ob_ref[l]  # residual

        # ---- MLP block ----
        h2 = _layer_norm(x, ln2w_ref[l], ln2b_ref[l])
        m = jnp.dot(h2.astype(BF16), f1w_ref[l],
                    preferred_element_type=jnp.float32) + f1b_ref[l]     # (BNP, FF) f32
        m = _gelu_tanh(m)
        x = x + jnp.dot(m.astype(BF16), f2w_ref[l],
                        preferred_element_type=jnp.float32) + f2b_ref[l]

    # ---- final LayerNorm ----
    o_ref[...] = _layer_norm(x, normw_ref[...], normb_ref[...])


# --------------------------- glue (plain JAX) ---------------------------------
def extract_patches(x):
    # x: (B, C, IMG, IMG) NCHW -> (B*NP, C*PATCH*PATCH); flatten order (C, ph, pw)
    # matches the (CPP, D)-reshaped conv weight.
    hp = IMG // PATCH
    x = x.reshape(B, C, hp, PATCH, hp, PATCH)
    x = x.transpose(0, 2, 4, 1, 3, 5)            # (B, hp, wp, C, p, p)
    return x.reshape(B * NP, CPP)


def prepare_params(params):
    """One-time prep (call at init, NOT per step):
    stack per-layer weights, fuse QKV, fold attn scale and patch bias,
    cast MXU weights to bf16, precompute the block-diag attention bias."""
    scale = HD ** -0.5
    layers = params["layers"]

    def stk(name, dtype=jnp.float32):
        return jnp.stack([lp[name] for lp in layers], axis=0).astype(dtype)

    qkv_w = jnp.stack([jnp.concatenate(
        [lp["q_w"] * scale, lp["k_w"], lp["v_w"]], axis=1) for lp in layers],
        axis=0).astype(BF16)
    qkv_b = jnp.stack([jnp.concatenate(
        [lp["q_b"] * scale, lp["k_b"], lp["v_b"]], axis=1) for lp in layers], axis=0)

    pos_bias = jnp.tile(params["pos"], (B, 1)) + params["patch_b"]   # (BNP, D) f32

    # Block-diagonal additive bias: queries attend only within their own image.
    img_id = jnp.arange(BNP, dtype=jnp.int32) // NP
    attn_bias = jnp.where(img_id[:, None] == img_id[None, :],
                          jnp.float32(0.0), jnp.float32(-1e30))      # (BNP, BNP)

    return dict(
        patch_w=params["patch_w"].astype(BF16),
        pos_bias=pos_bias, attn_bias=attn_bias,
        ln1_w=stk("ln1_w"), ln1_b=stk("ln1_b"),
        qkv_w=qkv_w, qkv_b=qkv_b,
        o_w=stk("o_w", BF16), o_b=stk("o_b"),
        ln2_w=stk("ln2_w"), ln2_b=stk("ln2_b"),
        fc1_w=stk("fc1_w", BF16), fc1_b=stk("fc1_b"),
        fc2_w=stk("fc2_w", BF16), fc2_b=stk("fc2_b"),
        norm_w=params["norm_w"], norm_b=params["norm_b"],
    )


def _vmem_spec():
    return pl.BlockSpec(memory_space=pltpu.MemorySpace.VMEM)


_FLOPS = (2 * BNP * CPP * D
          + LAYERS * (2 * BNP * D * (3 * D)
                      + H * (2 * BNP * HD * BNP        # scores
                             + 2 * BNP * BNP * HD)     # p @ v
                      + 2 * BNP * D * D                # out projection
                      + 2 * BNP * D * FF + 2 * BNP * FF * D))
_TRANS = LAYERS * (H * (BNP * BNP + BNP) + BNP * FF) + (2 * LAYERS + 1) * BNP


@jax.jit
def siglip_vit_forward(x, pp):
    patches = extract_patches(x).astype(BF16)                        # (BNP, CPP)
    args = (patches, pp["patch_w"], pp["pos_bias"], pp["attn_bias"],
            pp["ln1_w"], pp["ln1_b"], pp["qkv_w"], pp["qkv_b"],
            pp["o_w"], pp["o_b"],
            pp["ln2_w"], pp["ln2_b"],
            pp["fc1_w"], pp["fc1_b"], pp["fc2_w"], pp["fc2_b"],
            pp["norm_w"], pp["norm_b"])
    bytes_accessed = int(sum(a.size * a.dtype.itemsize for a in args)
                         + BNP * D * 4)
    out = pl.pallas_call(
        fused_vit_kernel,
        out_shape=jax.ShapeDtypeStruct((BNP, D), jnp.float32),
        in_specs=[_vmem_spec() for _ in args],
        out_specs=_vmem_spec(),
        cost_estimate=pl.CostEstimate(flops=_FLOPS,
                                      transcendentals=_TRANS,
                                      bytes_accessed=bytes_accessed),
    )(*args)
    return out.reshape(B, NP, D)


# ------------------------- deterministic parameters ---------------------------
def init_params(key):
    keys = iter(jax.random.split(key, 64))

    def w(shape, scale=0.02):
        return (scale * jax.random.normal(next(keys), shape)).astype(jnp.float32)

    params = {
        # conv patch-embed weight, pre-flattened to (C*p*p, D) for x @ W form
        "patch_w": w((CPP, D)),
        "patch_b": jnp.zeros((1, D), jnp.float32),
        # position embedding table (num_positions, D)
        "pos": w((NP, D)),
        "norm_w": jnp.ones((1, D), jnp.float32),
        "norm_b": jnp.zeros((1, D), jnp.float32),
        "layers": [],
    }
    for _ in range(LAYERS):
        lp = {
            "ln1_w": jnp.ones((1, D), jnp.float32),
            "ln1_b": jnp.zeros((1, D), jnp.float32),
            "q_w": w((D, D)), "q_b": jnp.zeros((1, D), jnp.float32),
            "k_w": w((D, D)), "k_b": jnp.zeros((1, D), jnp.float32),
            "v_w": w((D, D)), "v_b": jnp.zeros((1, D), jnp.float32),
            "o_w": w((D, D)), "o_b": jnp.zeros((1, D), jnp.float32),
            "ln2_w": jnp.ones((1, D), jnp.float32),
            "ln2_b": jnp.zeros((1, D), jnp.float32),
            "fc1_w": w((D, FF)), "fc1_b": jnp.zeros((1, FF), jnp.float32),
            "fc2_w": w((FF, D)), "fc2_b": jnp.zeros((1, D), jnp.float32),
        }
        params["layers"].append(lp)
    return params


# ----------------------------------- main --------------------------------------
if __name__ == "__main__":
    root = jax.random.PRNGKey(0)
    kx, kp = jax.random.split(root)
    x = jax.random.normal(kx, (B, C, IMG, IMG), dtype=jnp.float32)  # NCHW
    params = init_params(kp)

    # One-time parameter prep (hoisted out of the per-step path).
    prepared = jax.tree_util.tree_map(jax.block_until_ready, prepare_params(params))

    out = siglip_vit_forward(x, prepared)
    out = jax.block_until_ready(out)
    assert out.shape == (B, NP, D), out.shape
    assert jnp.all(jnp.isfinite(out))
    print("KERNEL_OK")
</pallas_src>

<mosaic_0001>
module attributes {stable_mosaic.version = 11 : i64} {
  func.func @fused_vit_kernel(%arg0: memref<8x192xbf16, #tpu.memory_space<vmem>>, %arg1: memref<192x32xbf16, #tpu.memory_space<vmem>>, %arg2: memref<8x32xf32, #tpu.memory_space<vmem>>, %arg3: memref<8x8xf32, #tpu.memory_space<vmem>>, %arg4: memref<2x1x32xf32, #tpu.memory_space<vmem>>, %arg5: memref<2x1x32xf32, #tpu.memory_space<vmem>>, %arg6: memref<2x32x96xbf16, #tpu.memory_space<vmem>>, %arg7: memref<2x1x96xf32, #tpu.memory_space<vmem>>, %arg8: memref<2x32x32xbf16, #tpu.memory_space<vmem>>, %arg9: memref<2x1x32xf32, #tpu.memory_space<vmem>>, %arg10: memref<2x1x32xf32, #tpu.memory_space<vmem>>, %arg11: memref<2x1x32xf32, #tpu.memory_space<vmem>>, %arg12: memref<2x32x64xbf16, #tpu.memory_space<vmem>>, %arg13: memref<2x1x64xf32, #tpu.memory_space<vmem>>, %arg14: memref<2x64x32xbf16, #tpu.memory_space<vmem>>, %arg15: memref<2x1x32xf32, #tpu.memory_space<vmem>>, %arg16: memref<1x32xf32, #tpu.memory_space<vmem>>, %arg17: memref<1x32xf32, #tpu.memory_space<vmem>>, %arg18: memref<8x32xf32, #tpu.memory_space<vmem>>) attributes {dimension_semantics = [], scalar_prefetch = 0 : i64, scratch_operands = 0 : i64, tpu.core_type = #tpu.core_type<tc>} {
    %c0 = arith.constant 0 : index
    %c0_0 = arith.constant 0 : index
    %0 = vector.load %arg3[%c0, %c0_0] : memref<8x8xf32, #tpu.memory_space<vmem>>, vector<8x8xf32>
    %c0_1 = arith.constant 0 : index
    %c0_2 = arith.constant 0 : index
    %1 = vector.load %arg0[%c0_1, %c0_2] : memref<8x192xbf16, #tpu.memory_space<vmem>>, vector<8x192xbf16>
    %c0_3 = arith.constant 0 : index
    %c0_4 = arith.constant 0 : index
    %2 = vector.load %arg1[%c0_3, %c0_4] : memref<192x32xbf16, #tpu.memory_space<vmem>>, vector<192x32xbf16>
    %cst = arith.constant dense<0.000000e+00> : vector<8x32xf32>
    %3 = tpu.matmul %1, %2, %cst {dimension_numbers = #tpu.dot_dimension_numbers<[1], [0], [0], [1], [0, 0, 1, 1], [], []>} : vector<8x192xbf16>, vector<192x32xbf16>, vector<8x32xf32> -> vector<8x32xf32>
    %c0_5 = arith.constant 0 : index
    %c0_6 = arith.constant 0 : index
    %4 = vector.load %arg2[%c0_5, %c0_6] : memref<8x32xf32, #tpu.memory_space<vmem>>, vector<8x32xf32>
    %5 = arith.addf %3, %4 : vector<8x32xf32>
    %c0_7 = arith.constant 0 : index
    %c0_8 = arith.constant 0 : index
    %c0_9 = arith.constant 0 : index
    %6 = vector.load %arg4[%c0_7, %c0_8, %c0_9] : memref<2x1x32xf32, #tpu.memory_space<vmem>>, vector<1x1x32xf32>
    %7 = vector.shape_cast %6 : vector<1x1x32xf32> to vector<1x32xf32>
    %c0_10 = arith.constant 0 : index
    %c0_11 = arith.constant 0 : index
    %c0_12 = arith.constant 0 : index
    %8 = vector.load %arg5[%c0_10, %c0_11, %c0_12] : memref<2x1x32xf32, #tpu.memory_space<vmem>>, vector<1x1x32xf32>
    %9 = vector.shape_cast %8 : vector<1x1x32xf32> to vector<1x32xf32>
    %cst_13 = arith.constant dense<0.000000e+00> : vector<8xf32>
    %10 = vector.multi_reduction <add>, %5, %cst_13 [1] : vector<8x32xf32> to vector<8xf32>
    %11 = vector.shape_cast %10 : vector<8xf32> to vector<8x1xf32>
    %cst_14 = arith.constant 3.200000e+01 : f32
    %12 = vector.broadcast %cst_14 : f32 to vector<8x1xf32>
    %13 = arith.divf %11, %12 : vector<8x1xf32>
    %14 = vector.broadcast %13 : vector<8x1xf32> to vector<8x32xf32>
    %15 = arith.subf %5, %14 : vector<8x32xf32>
    %16 = arith.mulf %15, %15 : vector<8x32xf32>
    %cst_15 = arith.constant dense<0.000000e+00> : vector<8xf32>
    %17 = vector.multi_reduction <add>, %16, %cst_15 [1] : vector<8x32xf32> to vector<8xf32>
    %18 = vector.shape_cast %17 : vector<8xf32> to vector<8x1xf32>
    %cst_16 = arith.constant 3.200000e+01 : f32
    %19 = vector.broadcast %cst_16 : f32 to vector<8x1xf32>
    %20 = arith.divf %18, %19 : vector<8x1xf32>
    %21 = vector.broadcast %13 : vector<8x1xf32> to vector<8x32xf32>
    %22 = arith.subf %5, %21 : vector<8x32xf32>
    %cst_17 = arith.constant 9.99999997E-7 : f32
    %23 = vector.broadcast %cst_17 : f32 to vector<8x1xf32>
    %24 = arith.addf %20, %23 : vector<8x1xf32>
    %25 = math.rsqrt %24 : vector<8x1xf32>
    %26 = vector.broadcast %25 : vector<8x1xf32> to vector<8x32xf32>
    %27 = arith.mulf %22, %26 : vector<8x32xf32>
    %28 = vector.broadcast %7 : vector<1x32xf32> to vector<8x32xf32>
    %29 = arith.mulf %27, %28 : vector<8x32xf32>
    %30 = vector.broadcast %9 : vector<1x32xf32> to vector<8x32xf32>
    %31 = arith.addf %29, %30 : vector<8x32xf32>
    %32 = arith.truncf %31 : vector<8x32xf32> to vector<8x32xbf16>
    %c0_18 = arith.constant 0 : index
    %c0_19 = arith.constant 0 : index
    %c0_20 = arith.constant 0 : index
    %33 = vector.load %arg6[%c0_18, %c0_19, %c0_20] : memref<2x32x96xbf16, #tpu.memory_space<vmem>>, vector<1x32x96xbf16>
    %34 = vector.shape_cast %33 : vector<1x32x96xbf16> to vector<32x96xbf16>
    %cst_21 = arith.constant dense<0.000000e+00> : vector<8x96xf32>
    %35 = tpu.matmul %32, %34, %cst_21 {dimension_numbers = #tpu.dot_dimension_numbers<[1], [0], [0], [1], [0, 0, 1, 1], [], []>} : vector<8x32xbf16>, vector<32x96xbf16>, vector<8x96xf32> -> vector<8x96xf32>
    %c0_22 = arith.constant 0 : index
    %c0_23 = arith.constant 0 : index
    %c0_24 = arith.constant 0 : index
    %36 = vector.load %arg7[%c0_22, %c0_23, %c0_24] : memref<2x1x96xf32, #tpu.memory_space<vmem>>, vector<1x1x96xf32>
    %37 = vector.shape_cast %36 : vector<1x1x96xf32> to vector<1x96xf32>
    %38 = vector.broadcast %37 : vector<1x96xf32> to vector<8x96xf32>
    %39 = arith.addf %35, %38 : vector<8x96xf32>
    %40 = vector.extract_strided_slice %39 {offsets = [0, 0], sizes = [8, 16], strides = [1, 1]} : vector<8x96xf32> to vector<8x16xf32>
    %41 = arith.truncf %40 : vector<8x16xf32> to vector<8x16xbf16>
    %42 = vector.extract_strided_slice %39 {offsets = [0, 32], sizes = [8, 16], strides = [1, 1]} : vector<8x96xf32> to vector<8x16xf32>
    %43 = arith.truncf %42 : vector<8x16xf32> to vector<8x16xbf16>
    %44 = vector.extract_strided_slice %39 {offsets = [0, 64], sizes = [8, 16], strides = [1, 1]} : vector<8x96xf32> to vector<8x16xf32>
    %45 = arith.truncf %44 : vector<8x16xf32> to vector<8x16xbf16>
    %cst_25 = arith.constant dense<0.000000e+00> : vector<8x8xf32>
    %46 = tpu.matmul %41, %43, %cst_25 {dimension_numbers = #tpu.dot_dimension_numbers<[1], [1], [0], [0], [0, 0, 1, 0], [], []>} : vector<8x16xbf16>, vector<8x16xbf16>, vector<8x8xf32> -> vector<8x8xf32>
    %47 = arith.addf %46, %0 : vector<8x8xf32>
    %cst_26 = arith.constant dense<0xFF800000> : vector<8xf32>
    %48 = vector.multi_reduction <maximumf>, %47, %cst_26 [1] : vector<8x8xf32> to vector<8xf32>
    %49 = vector.shape_cast %48 : vector<8xf32> to vector<8x1xf32>
    %50 = vector.broadcast %49 : vector<8x1xf32> to vector<8x8xf32>
    %51 = arith.subf %47, %50 : vector<8x8xf32>
    %52 = math.exp %51 : vector<8x8xf32>
    %cst_27 = arith.constant dense<0.000000e+00> : vector<8xf32>
    %53 = vector.multi_reduction <add>, %52, %cst_27 [1] : vector<8x8xf32> to vector<8xf32>
    %54 = vector.shape_cast %53 : vector<8xf32> to vector<8x1xf32>
    %55 = tpu.reciprocal %54 {approx = true} : vector<8x1xf32> -> vector<8x1xf32>
    %56 = vector.broadcast %55 : vector<8x1xf32> to vector<8x8xf32>
    %57 = arith.mulf %52, %56 : vector<8x8xf32>
    %58 = arith.truncf %57 : vector<8x8xf32> to vector<8x8xbf16>
    %cst_28 = arith.constant dense<0.000000e+00> : vector<8x16xf32>
    %59 = tpu.matmul %58, %45, %cst_28 {dimension_numbers = #tpu.dot_dimension_numbers<[1], [0], [0], [1], [0, 0, 1, 1], [], []>} : vector<8x8xbf16>, vector<8x16xbf16>, vector<8x16xf32> -> vector<8x16xf32>
    %60 = vector.extract_strided_slice %39 {offsets = [0, 16], sizes = [8, 16], strides = [1, 1]} : vector<8x96xf32> to vector<8x16xf32>
    %61 = arith.truncf %60 : vector<8x16xf32> to vector<8x16xbf16>
    %62 = vector.extract_strided_slice %39 {offsets = [0, 48], sizes = [8, 16], strides = [1, 1]} : vector<8x96xf32> to vector<8x16xf32>
    %63 = arith.truncf %62 : vector<8x16xf32> to vector<8x16xbf16>
    %64 = vector.extract_strided_slice %39 {offsets = [0, 80], sizes = [8, 16], strides = [1, 1]} : vector<8x96xf32> to vector<8x16xf32>
    %65 = arith.truncf %64 : vector<8x16xf32> to vector<8x16xbf16>
    %cst_29 = arith.constant dense<0.000000e+00> : vector<8x8xf32>
    %66 = tpu.matmul %61, %63, %cst_29 {dimension_numbers = #tpu.dot_dimension_numbers<[1], [1], [0], [0], [0, 0, 1, 0], [], []>} : vector<8x16xbf16>, vector<8x16xbf16>, vector<8x8xf32> -> vector<8x8xf32>
    %67 = arith.addf %66, %0 : vector<8x8xf32>
    %cst_30 = arith.constant dense<0xFF800000> : vector<8xf32>
    %68 = vector.multi_reduction <maximumf>, %67, %cst_30 [1] : vector<8x8xf32> to vector<8xf32>
    %69 = vector.shape_cast %68 : vector<8xf32> to vector<8x1xf32>
    %70 = vector.broadcast %69 : vector<8x1xf32> to vector<8x8xf32>
    %71 = arith.subf %67, %70 : vector<8x8xf32>
    %72 = math.exp %71 : vector<8x8xf32>
    %cst_31 = arith.constant dense<0.000000e+00> : vector<8xf32>
    %73 = vector.multi_reduction <add>, %72, %cst_31 [1] : vector<8x8xf32> to vector<8xf32>
    %74 = vector.shape_cast %73 : vector<8xf32> to vector<8x1xf32>
    %75 = tpu.reciprocal %74 {approx = true} : vector<8x1xf32> -> vector<8x1xf32>
    %76 = vector.broadcast %75 : vector<8x1xf32> to vector<8x8xf32>
    %77 = arith.mulf %72, %76 : vector<8x8xf32>
    %78 = arith.truncf %77 : vector<8x8xf32> to vector<8x8xbf16>
    %cst_32 = arith.constant dense<0.000000e+00> : vector<8x16xf32>
    %79 = tpu.matmul %78, %65, %cst_32 {dimension_numbers = #tpu.dot_dimension_numbers<[1], [0], [0], [1], [0, 0, 1, 1], [], []>} : vector<8x8xbf16>, vector<8x16xbf16>, vector<8x16xf32> -> vector<8x16xf32>
    %80 = tpu.concatenate %59, %79 in 1 : vector<8x16xf32>, vector<8x16xf32> -> vector<8x32xf32>
    %81 = arith.truncf %80 : vector<8x32xf32> to vector<8x32xbf16>
    %c0_33 = arith.constant 0 : index
    %c0_34 = arith.constant 0 : index
    %c0_35 = arith.constant 0 : index
    %82 = vector.load %arg8[%c0_33, %c0_34, %c0_35] : memref<2x32x32xbf16, #tpu.memory_space<vmem>>, vector<1x32x32xbf16>
    %83 = vector.shape_cast %82 : vector<1x32x32xbf16> to vector<32x32xbf16>
    %cst_36 = arith.constant dense<0.000000e+00> : vector<8x32xf32>
    %84 = tpu.matmul %81, %83, %cst_36 {dimension_numbers = #tpu.dot_dimension_numbers<[1], [0], [0], [1], [0, 0, 1, 1], [], []>} : vector<8x32xbf16>, vector<32x32xbf16>, vector<8x32xf32> -> vector<8x32xf32>
    %85 = arith.addf %5, %84 : vector<8x32xf32>
    %c0_37 = arith.constant 0 : index
    %c0_38 = arith.constant 0 : index
    %c0_39 = arith.constant 0 : index
    %86 = vector.load %arg9[%c0_37, %c0_38, %c0_39] : memref<2x1x32xf32, #tpu.memory_space<vmem>>, vector<1x1x32xf32>
    %87 = vector.shape_cast %86 : vector<1x1x32xf32> to vector<1x32xf32>
    %88 = vector.broadcast %87 : vector<1x32xf32> to vector<8x32xf32>
    %89 = arith.addf %85, %88 : vector<8x32xf32>
    %c0_40 = arith.constant 0 : index
    %c0_41 = arith.constant 0 : index
    %c0_42 = arith.constant 0 : index
    %90 = vector.load %arg10[%c0_40, %c0_41, %c0_42] : memref<2x1x32xf32, #tpu.memory_space<vmem>>, vector<1x1x32xf32>
    %91 = vector.shape_cast %90 : vector<1x1x32xf32> to vector<1x32xf32>
    %c0_43 = arith.constant 0 : index
    %c0_44 = arith.constant 0 : index
    %c0_45 = arith.constant 0 : index
    %92 = vector.load %arg11[%c0_43, %c0_44, %c0_45] : memref<2x1x32xf32, #tpu.memory_space<vmem>>, vector<1x1x32xf32>
    %93 = vector.shape_cast %92 : vector<1x1x32xf32> to vector<1x32xf32>
    %cst_46 = arith.constant dense<0.000000e+00> : vector<8xf32>
    %94 = vector.multi_reduction <add>, %89, %cst_46 [1] : vector<8x32xf32> to vector<8xf32>
    %95 = vector.shape_cast %94 : vector<8xf32> to vector<8x1xf32>
    %cst_47 = arith.constant 3.200000e+01 : f32
    %96 = vector.broadcast %cst_47 : f32 to vector<8x1xf32>
    %97 = arith.divf %95, %96 : vector<8x1xf32>
    %98 = vector.broadcast %97 : vector<8x1xf32> to vector<8x32xf32>
    %99 = arith.subf %89, %98 : vector<8x32xf32>
    %100 = arith.mulf %99, %99 : vector<8x32xf32>
    %cst_48 = arith.constant dense<0.000000e+00> : vector<8xf32>
    %101 = vector.multi_reduction <add>, %100, %cst_48 [1] : vector<8x32xf32> to vector<8xf32>
    %102 = vector.shape_cast %101 : vector<8xf32> to vector<8x1xf32>
    %cst_49 = arith.constant 3.200000e+01 : f32
    %103 = vector.broadcast %cst_49 : f32 to vector<8x1xf32>
    %104 = arith.divf %102, %103 : vector<8x1xf32>
    %105 = vector.broadcast %97 : vector<8x1xf32> to vector<8x32xf32>
    %106 = arith.subf %89, %105 : vector<8x32xf32>
    %cst_50 = arith.constant 9.99999997E-7 : f32
    %107 = vector.broadcast %cst_50 : f32 to vector<8x1xf32>
    %108 = arith.addf %104, %107 : vector<8x1xf32>
    %109 = math.rsqrt %108 : vector<8x1xf32>
    %110 = vector.broadcast %109 : vector<8x1xf32> to vector<8x32xf32>
    %111 = arith.mulf %106, %110 : vector<8x32xf32>
    %112 = vector.broadcast %91 : vector<1x32xf32> to vector<8x32xf32>
    %113 = arith.mulf %111, %112 : vector<8x32xf32>
    %114 = vector.broadcast %93 : vector<1x32xf32> to vector<8x32xf32>
    %115 = arith.addf %113, %114 : vector<8x32xf32>
    %116 = arith.truncf %115 : vector<8x32xf32> to vector<8x32xbf16>
    %c0_51 = arith.constant 0 : index
    %c0_52 = arith.constant 0 : index
    %c0_53 = arith.constant 0 : index
    %117 = vector.load %arg12[%c0_51, %c0_52, %c0_53] : memref<2x32x64xbf16, #tpu.memory_space<vmem>>, vector<1x32x64xbf16>
    %118 = vector.shape_cast %117 : vector<1x32x64xbf16> to vector<32x64xbf16>
    %cst_54 = arith.constant dense<0.000000e+00> : vector<8x64xf32>
    %119 = tpu.matmul %116, %118, %cst_54 {dimension_numbers = #tpu.dot_dimension_numbers<[1], [0], [0], [1], [0, 0, 1, 1], [], []>} : vector<8x32xbf16>, vector<32x64xbf16>, vector<8x64xf32> -> vector<8x64xf32>
    %c0_55 = arith.constant 0 : index
    %c0_56 = arith.constant 0 : index
    %c0_57 = arith.constant 0 : index
    %120 = vector.load %arg13[%c0_55, %c0_56, %c0_57] : memref<2x1x64xf32, #tpu.memory_space<vmem>>, vector<1x1x64xf32>
    %121 = vector.shape_cast %120 : vector<1x1x64xf32> to vector<1x64xf32>
    %122 = vector.broadcast %121 : vector<1x64xf32> to vector<8x64xf32>
    %123 = arith.addf %119, %122 : vector<8x64xf32>
    %cst_58 = arith.constant 5.000000e-01 : f32
    %124 = vector.broadcast %cst_58 : f32 to vector<8x64xf32>
    %125 = arith.mulf %124, %123 : vector<8x64xf32>
    %cst_59 = arith.constant 4.471500e-02 : f32
    %126 = vector.broadcast %cst_59 : f32 to vector<8x64xf32>
    %127 = arith.mulf %126, %123 : vector<8x64xf32>
    %128 = arith.mulf %127, %123 : vector<8x64xf32>
    %129 = arith.mulf %128, %123 : vector<8x64xf32>
    %130 = arith.addf %123, %129 : vector<8x64xf32>
    %cst_60 = arith.constant 0.797884583 : f32
    %131 = vector.broadcast %cst_60 : f32 to vector<8x64xf32>
    %132 = arith.mulf %131, %130 : vector<8x64xf32>
    %133 = math.tanh %132 : vector<8x64xf32>
    %cst_61 = arith.constant 1.000000e+00 : f32
    %134 = vector.broadcast %cst_61 : f32 to vector<8x64xf32>
    %135 = arith.addf %134, %133 : vector<8x64xf32>
    %136 = arith.mulf %125, %135 : vector<8x64xf32>
    %137 = arith.truncf %136 : vector<8x64xf32> to vector<8x64xbf16>
    %c0_62 = arith.constant 0 : index
    %c0_63 = arith.constant 0 : index
    %c0_64 = arith.constant 0 : index
    %138 = vector.load %arg14[%c0_62, %c0_63, %c0_64] : memref<2x64x32xbf16, #tpu.memory_space<vmem>>, vector<1x64x32xbf16>
    %139 = vector.shape_cast %138 : vector<1x64x32xbf16> to vector<64x32xbf16>
    %cst_65 = arith.constant dense<0.000000e+00> : vector<8x32xf32>
    %140 = tpu.matmul %137, %139, %cst_65 {dimension_numbers = #tpu.dot_dimension_numbers<[1], [0], [0], [1], [0, 0, 1, 1], [], []>} : vector<8x64xbf16>, vector<64x32xbf16>, vector<8x32xf32> -> vector<8x32xf32>
    %141 = arith.addf %89, %140 : vector<8x32xf32>
    %c0_66 = arith.constant 0 : index
    %c0_67 = arith.constant 0 : index
    %c0_68 = arith.constant 0 : index
    %142 = vector.load %arg15[%c0_66, %c0_67, %c0_68] : memref<2x1x32xf32, #tpu.memory_space<vmem>>, vector<1x1x32xf32>
    %143 = vector.shape_cast %142 : vector<1x1x32xf32> to vector<1x32xf32>
    %144 = vector.broadcast %143 : vector<1x32xf32> to vector<8x32xf32>
    %145 = arith.addf %141, %144 : vector<8x32xf32>
    %c1 = arith.constant 1 : index
    %c0_69 = arith.constant 0 : index
    %c0_70 = arith.constant 0 : index
    %146 = vector.load %arg4[%c1, %c0_69, %c0_70] : memref<2x1x32xf32, #tpu.memory_space<vmem>>, vector<1x1x32xf32>
    %147 = vector.shape_cast %146 : vector<1x1x32xf32> to vector<1x32xf32>
    %c1_71 = arith.constant 1 : index
    %c0_72 = arith.constant 0 : index
    %c0_73 = arith.constant 0 : index
    %148 = vector.load %arg5[%c1_71, %c0_72, %c0_73] : memref<2x1x32xf32, #tpu.memory_space<vmem>>, vector<1x1x32xf32>
    %149 = vector.shape_cast %148 : vector<1x1x32xf32> to vector<1x32xf32>
    %cst_74 = arith.constant dense<0.000000e+00> : vector<8xf32>
    %150 = vector.multi_reduction <add>, %145, %cst_74 [1] : vector<8x32xf32> to vector<8xf32>
    %151 = vector.shape_cast %150 : vector<8xf32> to vector<8x1xf32>
    %cst_75 = arith.constant 3.200000e+01 : f32
    %152 = vector.broadcast %cst_75 : f32 to vector<8x1xf32>
    %153 = arith.divf %151, %152 : vector<8x1xf32>
    %154 = vector.broadcast %153 : vector<8x1xf32> to vector<8x32xf32>
    %155 = arith.subf %145, %154 : vector<8x32xf32>
    %156 = arith.mulf %155, %155 : vector<8x32xf32>
    %cst_76 = arith.constant dense<0.000000e+00> : vector<8xf32>
    %157 = vector.multi_reduction <add>, %156, %cst_76 [1] : vector<8x32xf32> to vector<8xf32>
    %158 = vector.shape_cast %157 : vector<8xf32> to vector<8x1xf32>
    %cst_77 = arith.constant 3.200000e+01 : f32
    %159 = vector.broadcast %cst_77 : f32 to vector<8x1xf32>
    %160 = arith.divf %158, %159 : vector<8x1xf32>
    %161 = vector.broadcast %153 : vector<8x1xf32> to vector<8x32xf32>
    %162 = arith.subf %145, %161 : vector<8x32xf32>
    %cst_78 = arith.constant 9.99999997E-7 : f32
    %163 = vector.broadcast %cst_78 : f32 to vector<8x1xf32>
    %164 = arith.addf %160, %163 : vector<8x1xf32>
    %165 = math.rsqrt %164 : vector<8x1xf32>
    %166 = vector.broadcast %165 : vector<8x1xf32> to vector<8x32xf32>
    %167 = arith.mulf %162, %166 : vector<8x32xf32>
    %168 = vector.broadcast %147 : vector<1x32xf32> to vector<8x32xf32>
    %169 = arith.mulf %167, %168 : vector<8x32xf32>
    %170 = vector.broadcast %149 : vector<1x32xf32> to vector<8x32xf32>
    %171 = arith.addf %169, %170 : vector<8x32xf32>
    %172 = arith.truncf %171 : vector<8x32xf32> to vector<8x32xbf16>
    %c1_79 = arith.constant 1 : index
    %c0_80 = arith.constant 0 : index
    %c0_81 = arith.constant 0 : index
    %173 = vector.load %arg6[%c1_79, %c0_80, %c0_81] : memref<2x32x96xbf16, #tpu.memory_space<vmem>>, vector<1x32x96xbf16>
    %174 = vector.shape_cast %173 : vector<1x32x96xbf16> to vector<32x96xbf16>
    %cst_82 = arith.constant dense<0.000000e+00> : vector<8x96xf32>
    %175 = tpu.matmul %172, %174, %cst_82 {dimension_numbers = #tpu.dot_dimension_numbers<[1], [0], [0], [1], [0, 0, 1, 1], [], []>} : vector<8x32xbf16>, vector<32x96xbf16>, vector<8x96xf32> -> vector<8x96xf32>
    %c1_83 = arith.constant 1 : index
    %c0_84 = arith.constant 0 : index
    %c0_85 = arith.constant 0 : index
    %176 = vector.load %arg7[%c1_83, %c0_84, %c0_85] : memref<2x1x96xf32, #tpu.memory_space<vmem>>, vector<1x1x96xf32>
    %177 = vector.shape_cast %176 : vector<1x1x96xf32> to vector<1x96xf32>
    %178 = vector.broadcast %177 : vector<1x96xf32> to vector<8x96xf32>
    %179 = arith.addf %175, %178 : vector<8x96xf32>
    %180 = vector.extract_strided_slice %179 {offsets = [0, 0], sizes = [8, 16], strides = [1, 1]} : vector<8x96xf32> to vector<8x16xf32>
    %181 = arith.truncf %180 : vector<8x16xf32> to vector<8x16xbf16>
    %182 = vector.extract_strided_slice %179 {offsets = [0, 32], sizes = [8, 16], strides = [1, 1]} : vector<8x96xf32> to vector<8x16xf32>
    %183 = arith.truncf %182 : vector<8x16xf32> to vector<8x16xbf16>
    %184 = vector.extract_strided_slice %179 {offsets = [0, 64], sizes = [8, 16], strides = [1, 1]} : vector<8x96xf32> to vector<8x16xf32>
    %185 = arith.truncf %184 : vector<8x16xf32> to vector<8x16xbf16>
    %cst_86 = arith.constant dense<0.000000e+00> : vector<8x8xf32>
    %186 = tpu.matmul %181, %183, %cst_86 {dimension_numbers = #tpu.dot_dimension_numbers<[1], [1], [0], [0], [0, 0, 1, 0], [], []>} : vector<8x16xbf16>, vector<8x16xbf16>, vector<8x8xf32> -> vector<8x8xf32>
    %187 = arith.addf %186, %0 : vector<8x8xf32>
    %cst_87 = arith.constant dense<0xFF800000> : vector<8xf32>
    %188 = vector.multi_reduction <maximumf>, %187, %cst_87 [1] : vector<8x8xf32> to vector<8xf32>
    %189 = vector.shape_cast %188 : vector<8xf32> to vector<8x1xf32>
    %190 = vector.broadcast %189 : vector<8x1xf32> to vector<8x8xf32>
    %191 = arith.subf %187, %190 : vector<8x8xf32>
    %192 = math.exp %191 : vector<8x8xf32>
    %cst_88 = arith.constant dense<0.000000e+00> : vector<8xf32>
    %193 = vector.multi_reduction <add>, %192, %cst_88 [1] : vector<8x8xf32> to vector<8xf32>
    %194 = vector.shape_cast %193 : vector<8xf32> to vector<8x1xf32>
    %195 = tpu.reciprocal %194 {approx = true} : vector<8x1xf32> -> vector<8x1xf32>
    %196 = vector.broadcast %195 : vector<8x1xf32> to vector<8x8xf32>
    %197 = arith.mulf %192, %196 : vector<8x8xf32>
    %198 = arith.truncf %197 : vector<8x8xf32> to vector<8x8xbf16>
    %cst_89 = arith.constant dense<0.000000e+00> : vector<8x16xf32>
    %199 = tpu.matmul %198, %185, %cst_89 {dimension_numbers = #tpu.dot_dimension_numbers<[1], [0], [0], [1], [0, 0, 1, 1], [], []>} : vector<8x8xbf16>, vector<8x16xbf16>, vector<8x16xf32> -> vector<8x16xf32>
    %200 = vector.extract_strided_slice %179 {offsets = [0, 16], sizes = [8, 16], strides = [1, 1]} : vector<8x96xf32> to vector<8x16xf32>
    %201 = arith.truncf %200 : vector<8x16xf32> to vector<8x16xbf16>
    %202 = vector.extract_strided_slice %179 {offsets = [0, 48], sizes = [8, 16], strides = [1, 1]} : vector<8x96xf32> to vector<8x16xf32>
    %203 = arith.truncf %202 : vector<8x16xf32> to vector<8x16xbf16>
    %204 = vector.extract_strided_slice %179 {offsets = [0, 80], sizes = [8, 16], strides = [1, 1]} : vector<8x96xf32> to vector<8x16xf32>
    %205 = arith.truncf %204 : vector<8x16xf32> to vector<8x16xbf16>
    %cst_90 = arith.constant dense<0.000000e+00> : vector<8x8xf32>
    %206 = tpu.matmul %201, %203, %cst_90 {dimension_numbers = #tpu.dot_dimension_numbers<[1], [1], [0], [0], [0, 0, 1, 0], [], []>} : vector<8x16xbf16>, vector<8x16xbf16>, vector<8x8xf32> -> vector<8x8xf32>
    %207 = arith.addf %206, %0 : vector<8x8xf32>
    %cst_91 = arith.constant dense<0xFF800000> : vector<8xf32>
    %208 = vector.multi_reduction <maximumf>, %207, %cst_91 [1] : vector<8x8xf32> to vector<8xf32>
    %209 = vector.shape_cast %208 : vector<8xf32> to vector<8x1xf32>
    %210 = vector.broadcast %209 : vector<8x1xf32> to vector<8x8xf32>
    %211 = arith.subf %207, %210 : vector<8x8xf32>
    %212 = math.exp %211 : vector<8x8xf32>
    %cst_92 = arith.constant dense<0.000000e+00> : vector<8xf32>
    %213 = vector.multi_reduction <add>, %212, %cst_92 [1] : vector<8x8xf32> to vector<8xf32>
    %214 = vector.shape_cast %213 : vector<8xf32> to vector<8x1xf32>
    %215 = tpu.reciprocal %214 {approx = true} : vector<8x1xf32> -> vector<8x1xf32>
    %216 = vector.broadcast %215 : vector<8x1xf32> to vector<8x8xf32>
    %217 = arith.mulf %212, %216 : vector<8x8xf32>
    %218 = arith.truncf %217 : vector<8x8xf32> to vector<8x8xbf16>
    %cst_93 = arith.constant dense<0.000000e+00> : vector<8x16xf32>
    %219 = tpu.matmul %218, %205, %cst_93 {dimension_numbers = #tpu.dot_dimension_numbers<[1], [0], [0], [1], [0, 0, 1, 1], [], []>} : vector<8x8xbf16>, vector<8x16xbf16>, vector<8x16xf32> -> vector<8x16xf32>
    %220 = tpu.concatenate %199, %219 in 1 : vector<8x16xf32>, vector<8x16xf32> -> vector<8x32xf32>
    %221 = arith.truncf %220 : vector<8x32xf32> to vector<8x32xbf16>
    %c1_94 = arith.constant 1 : index
    %c0_95 = arith.constant 0 : index
    %c0_96 = arith.constant 0 : index
    %222 = vector.load %arg8[%c1_94, %c0_95, %c0_96] : memref<2x32x32xbf16, #tpu.memory_space<vmem>>, vector<1x32x32xbf16>
    %223 = vector.shape_cast %222 : vector<1x32x32xbf16> to vector<32x32xbf16>
    %cst_97 = arith.constant dense<0.000000e+00> : vector<8x32xf32>
    %224 = tpu.matmul %221, %223, %cst_97 {dimension_numbers = #tpu.dot_dimension_numbers<[1], [0], [0], [1], [0, 0, 1, 1], [], []>} : vector<8x32xbf16>, vector<32x32xbf16>, vector<8x32xf32> -> vector<8x32xf32>
    %225 = arith.addf %145, %224 : vector<8x32xf32>
    %c1_98 = arith.constant 1 : index
    %c0_99 = arith.constant 0 : index
    %c0_100 = arith.constant 0 : index
    %226 = vector.load %arg9[%c1_98, %c0_99, %c0_100] : memref<2x1x32xf32, #tpu.memory_space<vmem>>, vector<1x1x32xf32>
    %227 = vector.shape_cast %226 : vector<1x1x32xf32> to vector<1x32xf32>
    %228 = vector.broadcast %227 : vector<1x32xf32> to vector<8x32xf32>
    %229 = arith.addf %225, %228 : vector<8x32xf32>
    %c1_101 = arith.constant 1 : index
    %c0_102 = arith.constant 0 : index
    %c0_103 = arith.constant 0 : index
    %230 = vector.load %arg10[%c1_101, %c0_102, %c0_103] : memref<2x1x32xf32, #tpu.memory_space<vmem>>, vector<1x1x32xf32>
    %231 = vector.shape_cast %230 : vector<1x1x32xf32> to vector<1x32xf32>
    %c1_104 = arith.constant 1 : index
    %c0_105 = arith.constant 0 : index
    %c0_106 = arith.constant 0 : index
    %232 = vector.load %arg11[%c1_104, %c0_105, %c0_106] : memref<2x1x32xf32, #tpu.memory_space<vmem>>, vector<1x1x32xf32>
    %233 = vector.shape_cast %232 : vector<1x1x32xf32> to vector<1x32xf32>
    %cst_107 = arith.constant dense<0.000000e+00> : vector<8xf32>
    %234 = vector.multi_reduction <add>, %229, %cst_107 [1] : vector<8x32xf32> to vector<8xf32>
    %235 = vector.shape_cast %234 : vector<8xf32> to vector<8x1xf32>
    %cst_108 = arith.constant 3.200000e+01 : f32
    %236 = vector.broadcast %cst_108 : f32 to vector<8x1xf32>
    %237 = arith.divf %235, %236 : vector<8x1xf32>
    %238 = vector.broadcast %237 : vector<8x1xf32> to vector<8x32xf32>
    %239 = arith.subf %229, %238 : vector<8x32xf32>
    %240 = arith.mulf %239, %239 : vector<8x32xf32>
    %cst_109 = arith.constant dense<0.000000e+00> : vector<8xf32>
    %241 = vector.multi_reduction <add>, %240, %cst_109 [1] : vector<8x32xf32> to vector<8xf32>
    %242 = vector.shape_cast %241 : vector<8xf32> to vector<8x1xf32>
    %cst_110 = arith.constant 3.200000e+01 : f32
    %243 = vector.broadcast %cst_110 : f32 to vector<8x1xf32>
    %244 = arith.divf %242, %243 : vector<8x1xf32>
    %245 = vector.broadcast %237 : vector<8x1xf32> to vector<8x32xf32>
    %246 = arith.subf %229, %245 : vector<8x32xf32>
    %cst_111 = arith.constant 9.99999997E-7 : f32
    %247 = vector.broadcast %cst_111 : f32 to vector<8x1xf32>
    %248 = arith.addf %244, %247 : vector<8x1xf32>
    %249 = math.rsqrt %248 : vector<8x1xf32>
    %250 = vector.broadcast %249 : vector<8x1xf32> to vector<8x32xf32>
    %251 = arith.mulf %246, %250 : vector<8x32xf32>
    %252 = vector.broadcast %231 : vector<1x32xf32> to vector<8x32xf32>
    %253 = arith.mulf %251, %252 : vector<8x32xf32>
    %254 = vector.broadcast %233 : vector<1x32xf32> to vector<8x32xf32>
    %255 = arith.addf %253, %254 : vector<8x32xf32>
    %256 = arith.truncf %255 : vector<8x32xf32> to vector<8x32xbf16>
    %c1_112 = arith.constant 1 : index
    %c0_113 = arith.constant 0 : index
    %c0_114 = arith.constant 0 : index
    %257 = vector.load %arg12[%c1_112, %c0_113, %c0_114] : memref<2x32x64xbf16, #tpu.memory_space<vmem>>, vector<1x32x64xbf16>
    %258 = vector.shape_cast %257 : vector<1x32x64xbf16> to vector<32x64xbf16>
    %cst_115 = arith.constant dense<0.000000e+00> : vector<8x64xf32>
    %259 = tpu.matmul %256, %258, %cst_115 {dimension_numbers = #tpu.dot_dimension_numbers<[1], [0], [0], [1], [0, 0, 1, 1], [], []>} : vector<8x32xbf16>, vector<32x64xbf16>, vector<8x64xf32> -> vector<8x64xf32>
    %c1_116 = arith.constant 1 : index
    %c0_117 = arith.constant 0 : index
    %c0_118 = arith.constant 0 : index
    %260 = vector.load %arg13[%c1_116, %c0_117, %c0_118] : memref<2x1x64xf32, #tpu.memory_space<vmem>>, vector<1x1x64xf32>
    %261 = vector.shape_cast %260 : vector<1x1x64xf32> to vector<1x64xf32>
    %262 = vector.broadcast %261 : vector<1x64xf32> to vector<8x64xf32>
    %263 = arith.addf %259, %262 : vector<8x64xf32>
    %cst_119 = arith.constant 5.000000e-01 : f32
    %264 = vector.broadcast %cst_119 : f32 to vector<8x64xf32>
    %265 = arith.mulf %264, %263 : vector<8x64xf32>
    %cst_120 = arith.constant 4.471500e-02 : f32
    %266 = vector.broadcast %cst_120 : f32 to vector<8x64xf32>
    %267 = arith.mulf %266, %263 : vector<8x64xf32>
    %268 = arith.mulf %267, %263 : vector<8x64xf32>
    %269 = arith.mulf %268, %263 : vector<8x64xf32>
    %270 = arith.addf %263, %269 : vector<8x64xf32>
    %cst_121 = arith.constant 0.797884583 : f32
    %271 = vector.broadcast %cst_121 : f32 to vector<8x64xf32>
    %272 = arith.mulf %271, %270 : vector<8x64xf32>
    %273 = math.tanh %272 : vector<8x64xf32>
    %cst_122 = arith.constant 1.000000e+00 : f32
    %274 = vector.broadcast %cst_122 : f32 to vector<8x64xf32>
    %275 = arith.addf %274, %273 : vector<8x64xf32>
    %276 = arith.mulf %265, %275 : vector<8x64xf32>
    %277 = arith.truncf %276 : vector<8x64xf32> to vector<8x64xbf16>
    %c1_123 = arith.constant 1 : index
    %c0_124 = arith.constant 0 : index
    %c0_125 = arith.constant 0 : index
    %278 = vector.load %arg14[%c1_123, %c0_124, %c0_125] : memref<2x64x32xbf16, #tpu.memory_space<vmem>>, vector<1x64x32xbf16>
    %279 = vector.shape_cast %278 : vector<1x64x32xbf16> to vector<64x32xbf16>
    %cst_126 = arith.constant dense<0.000000e+00> : vector<8x32xf32>
    %280 = tpu.matmul %277, %279, %cst_126 {dimension_numbers = #tpu.dot_dimension_numbers<[1], [0], [0], [1], [0, 0, 1, 1], [], []>} : vector<8x64xbf16>, vector<64x32xbf16>, vector<8x32xf32> -> vector<8x32xf32>
    %281 = arith.addf %229, %280 : vector<8x32xf32>
    %c1_127 = arith.constant 1 : index
    %c0_128 = arith.constant 0 : index
    %c0_129 = arith.constant 0 : index
    %282 = vector.load %arg15[%c1_127, %c0_128, %c0_129] : memref<2x1x32xf32, #tpu.memory_space<vmem>>, vector<1x1x32xf32>
    %283 = vector.shape_cast %282 : vector<1x1x32xf32> to vector<1x32xf32>
    %284 = vector.broadcast %283 : vector<1x32xf32> to vector<8x32xf32>
    %285 = arith.addf %281, %284 : vector<8x32xf32>
    %c0_130 = arith.constant 0 : index
    %c0_131 = arith.constant 0 : index
    %286 = vector.load %arg16[%c0_130, %c0_131] : memref<1x32xf32, #tpu.memory_space<vmem>>, vector<1x32xf32>
    %c0_132 = arith.constant 0 : index
    %c0_133 = arith.constant 0 : index
    %287 = vector.load %arg17[%c0_132, %c0_133] : memref<1x32xf32, #tpu.memory_space<vmem>>, vector<1x32xf32>
    %cst_134 = arith.constant dense<0.000000e+00> : vector<8xf32>
    %288 = vector.multi_reduction <add>, %285, %cst_134 [1] : vector<8x32xf32> to vector<8xf32>
    %289 = vector.shape_cast %288 : vector<8xf32> to vector<8x1xf32>
    %cst_135 = arith.constant 3.200000e+01 : f32
    %290 = vector.broadcast %cst_135 : f32 to vector<8x1xf32>
    %291 = arith.divf %289, %290 : vector<8x1xf32>
    %292 = vector.broadcast %291 : vector<8x1xf32> to vector<8x32xf32>
    %293 = arith.subf %285, %292 : vector<8x32xf32>
    %294 = arith.mulf %293, %293 : vector<8x32xf32>
    %cst_136 = arith.constant dense<0.000000e+00> : vector<8xf32>
    %295 = vector.multi_reduction <add>, %294, %cst_136 [1] : vector<8x32xf32> to vector<8xf32>
    %296 = vector.shape_cast %295 : vector<8xf32> to vector<8x1xf32>
    %cst_137 = arith.constant 3.200000e+01 : f32
    %297 = vector.broadcast %cst_137 : f32 to vector<8x1xf32>
    %298 = arith.divf %296, %297 : vector<8x1xf32>
    %299 = vector.broadcast %291 : vector<8x1xf32> to vector<8x32xf32>
    %300 = arith.subf %285, %299 : vector<8x32xf32>
    %cst_138 = arith.constant 9.99999997E-7 : f32
    %301 = vector.broadcast %cst_138 : f32 to vector<8x1xf32>
    %302 = arith.addf %298, %301 : vector<8x1xf32>
    %303 = math.rsqrt %302 : vector<8x1xf32>
    %304 = vector.broadcast %303 : vector<8x1xf32> to vector<8x32xf32>
    %305 = arith.mulf %300, %304 : vector<8x32xf32>
    %306 = vector.broadcast %286 : vector<1x32xf32> to vector<8x32xf32>
    %307 = arith.mulf %305, %306 : vector<8x32xf32>
    %308 = vector.broadcast %287 : vector<1x32xf32> to vector<8x32xf32>
    %309 = arith.addf %307, %308 : vector<8x32xf32>
    %c0_139 = arith.constant 0 : index
    %c0_140 = arith.constant 0 : index
    %310 = vector.load %arg18[%c0_139, %c0_140] : memref<8x32xf32, #tpu.memory_space<vmem>>, vector<8x32xf32>
    tpu.vector_store %arg18[%c0_139, %c0_140], %309 {strides = array<i32>} : memref<8x32xf32, #tpu.memory_space<vmem>>, vector<8x32xf32>,
    return
  }
}

</mosaic_0001>

<llo_original>
// kernel: siglip_vit_forward.1
$region0: #{siglip_vit_forward.1}
  #allocation0 [shape = 'u32[]', space=smem, size = 0x4, offset = 0x4, fixed_abs, tag = 'smem constant byte address 0x4 - core index']
  #allocation1 [shape = 'u32[144,128]{1,0:T(1,128)}', space=vmem, size = 0x12000, scoped, tag = 'internal scratch']
  %s0 = inlined_call_operand.vmem [shape: bf16[8,192], index: 0, kind: input, shape index: {}]
  %s1 = inlined_call_operand.vmem [shape: bf16[192,32], index: 1, kind: input, shape index: {}]
  %s2 = inlined_call_operand.vmem [shape: f32[8,32], index: 2, kind: input, shape index: {}]
  %s3 = inlined_call_operand.vmem [shape: f32[8,8], index: 3, kind: input, shape index: {}]
  %s4 = inlined_call_operand.vmem [shape: f32[2,1,32], index: 4, kind: input, shape index: {}]
  %s5 = inlined_call_operand.vmem [shape: f32[2,1,32], index: 5, kind: input, shape index: {}]
  %s6 = inlined_call_operand.vmem [shape: bf16[2,32,96], index: 6, kind: input, shape index: {}]
  %s7 = inlined_call_operand.vmem [shape: f32[2,1,96], index: 7, kind: input, shape index: {}]
  %s8 = inlined_call_operand.vmem [shape: bf16[2,32,32], index: 8, kind: input, shape index: {}]
  %s9 = inlined_call_operand.vmem [shape: f32[2,1,32], index: 9, kind: input, shape index: {}]
  %s10 = inlined_call_operand.vmem [shape: f32[2,1,32], index: 10, kind: input, shape index: {}]
  %s11 = inlined_call_operand.vmem [shape: f32[2,1,32], index: 11, kind: input, shape index: {}]
  %s12 = inlined_call_operand.vmem [shape: bf16[2,32,64], index: 12, kind: input, shape index: {}]
  %s13 = inlined_call_operand.vmem [shape: f32[2,1,64], index: 13, kind: input, shape index: {}]
  %s14 = inlined_call_operand.vmem [shape: bf16[2,64,32], index: 14, kind: input, shape index: {}]
  %s15 = inlined_call_operand.vmem [shape: f32[2,1,32], index: 15, kind: input, shape index: {}]
  %s16 = inlined_call_operand.vmem [shape: f32[1,32], index: 16, kind: input, shape index: {}]
  %s17 = inlined_call_operand.vmem [shape: f32[1,32], index: 17, kind: input, shape index: {}]
  %s18 = inlined_call_operand.hbm [shape: f32[8,32], index: 18, kind: output, shape index: {}]
  %s19 = sld [smem:[#allocation0]]
  $region82: #{siglip_vit_forward.1} parent=0
    _
  %s21 = ssub.s32 1, %s19
  %s22 = scalar_select 0, %s21, %s19
  $region1: #{siglip_vit_forward.1} parent=0
    #allocation2 [shape = 'u8[4096]{0}', space=vmem, size = 0x1000, scoped, tag = 'output window, operand 0, single buffered']
    #allocation3 [shape = 's32[1]{0}', space=sflag, size = 0x4, scoped, tag = 'scoped memory for siglip_vit_forward.1']
    %23 = vsyncpa [#allocation3], 0
    // Predicated region
    $region2: #{siglip_vit_forward.1} parent=1 // pred_check
      _
    $region3: #{siglip_vit_forward.1} parent=1 // pred_check_branch
      %25 = sbr.rel (0) target = $region5
    $region4: #{siglip_vit_forward.1} parent=1 // pred_region
      _
    $region5: #{siglip_vit_forward.1} parent=1 // pred_fallthru
      _
    // Predicated region
    $region6: #{siglip_vit_forward.1} parent=1 // pred_check
      _
    $region7: #{siglip_vit_forward.1} parent=1 // pred_check_branch
      %27 = sbr.rel (0) target = $region9
    $region8: #{siglip_vit_forward.1} parent=1 // pred_region
      _
    $region9: #{siglip_vit_forward.1} parent=1 // pred_fallthru
      _
    // Predicated region
    $region10: #{siglip_vit_forward.1} parent=1 // pred_check
      _
    $region11: #{siglip_vit_forward.1} parent=1 // pred_check_branch
      %29 = sbr.rel (0) target = $region13
    $region12: #{siglip_vit_forward.1} parent=1 // pred_region
      _
    $region13: #{siglip_vit_forward.1} parent=1 // pred_fallthru
      _
    // Predicated region
    $region14: #{siglip_vit_forward.1} parent=1 // pred_check
      _
    $region15: #{siglip_vit_forward.1} parent=1 // pred_check_branch
      %31 = sbr.rel (0) target = $region17
    $region16: #{siglip_vit_forward.1} parent=1 // pred_region
      _
    $region17: #{siglip_vit_forward.1} parent=1 // pred_fallthru
      _
    // Predicated region
    $region18: #{siglip_vit_forward.1} parent=1 // pred_check
      _
    $region19: #{siglip_vit_forward.1} parent=1 // pred_check_branch
      %33 = sbr.rel (0) target = $region21
    $region20: #{siglip_vit_forward.1} parent=1 // pred_region
      _
    $region21: #{siglip_vit_forward.1} parent=1 // pred_fallthru
      _
    // Predicated region
    $region22: #{siglip_vit_forward.1} parent=1 // pred_check
      _
    $region23: #{siglip_vit_forward.1} parent=1 // pred_check_branch
      %35 = sbr.rel (0) target = $region25
    $region24: #{siglip_vit_forward.1} parent=1 // pred_region
      _
    $region25: #{siglip_vit_forward.1} parent=1 // pred_fallthru
      _
    // Predicated region
    $region26: #{siglip_vit_forward.1} parent=1 // pred_check
      _
    $region27: #{siglip_vit_forward.1} parent=1 // pred_check_branch
      %37 = sbr.rel (0) target = $region29
    $region28: #{siglip_vit_forward.1} parent=1 // pred_region
      _
    $region29: #{siglip_vit_forward.1} parent=1 // pred_fallthru
      _
    // Predicated region
    $region30: #{siglip_vit_forward.1} parent=1 // pred_check
      _
    $region31: #{siglip_vit_forward.1} parent=1 // pred_check_branch
      %39 = sbr.rel (0) target = $region33
    $region32: #{siglip_vit_forward.1} parent=1 // pred_region
      _
    $region33: #{siglip_vit_forward.1} parent=1 // pred_fallthru
      _
    // Predicated region
    $region34: #{siglip_vit_forward.1} parent=1 // pred_check
      _
    $region35: #{siglip_vit_forward.1} parent=1 // pred_check_branch
      %41 = sbr.rel (0) target = $region37
    $region36: #{siglip_vit_forward.1} parent=1 // pred_region
      _
    $region37: #{siglip_vit_forward.1} parent=1 // pred_fallthru
      _
    // Predicated region
    $region38: #{siglip_vit_forward.1} parent=1 // pred_check
      _
    $region39: #{siglip_vit_forward.1} parent=1 // pred_check_branch
      %43 = sbr.rel (0) target = $region41
    $region40: #{siglip_vit_forward.1} parent=1 // pred_region
      _
    $region41: #{siglip_vit_forward.1} parent=1 // pred_fallthru
      _
    // Predicated region
    $region42: #{siglip_vit_forward.1} parent=1 // pred_check
      _
    $region43: #{siglip_vit_forward.1} parent=1 // pred_check_branch
      %45 = sbr.rel (0) target = $region45
    $region44: #{siglip_vit_forward.1} parent=1 // pred_region
      _
    $region45: #{siglip_vit_forward.1} parent=1 // pred_fallthru
      _
    // Predicated region
    $region46: #{siglip_vit_forward.1} parent=1 // pred_check
      _
    $region47: #{siglip_vit_forward.1} parent=1 // pred_check_branch
      %47 = sbr.rel (0) target = $region49
    $region48: #{siglip_vit_forward.1} parent=1 // pred_region
      _
    $region49: #{siglip_vit_forward.1} parent=1 // pred_fallthru
      _
    // Predicated region
    $region50: #{siglip_vit_forward.1} parent=1 // pred_check
      _
    $region51: #{siglip_vit_forward.1} parent=1 // pred_check_branch
      %49 = sbr.rel (0) target = $region53
    $region52: #{siglip_vit_forward.1} parent=1 // pred_region
      _
    $region53: #{siglip_vit_forward.1} parent=1 // pred_fallthru
      _
    // Predicated region
    $region54: #{siglip_vit_forward.1} parent=1 // pred_check
      _
    $region55: #{siglip_vit_forward.1} parent=1 // pred_check_branch
      %51 = sbr.rel (0) target = $region57
    $region56: #{siglip_vit_forward.1} parent=1 // pred_region
      _
    $region57: #{siglip_vit_forward.1} parent=1 // pred_fallthru
      _
    // Predicated region
    $region58: #{siglip_vit_forward.1} parent=1 // pred_check
      _
    $region59: #{siglip_vit_forward.1} parent=1 // pred_check_branch
      %53 = sbr.rel (0) target = $region61
    $region60: #{siglip_vit_forward.1} parent=1 // pred_region
      _
    $region61: #{siglip_vit_forward.1} parent=1 // pred_fallthru
      _
    // Predicated region
    $region62: #{siglip_vit_forward.1} parent=1 // pred_check
      _
    $region63: #{siglip_vit_forward.1} parent=1 // pred_check_branch
      %55 = sbr.rel (0) target = $region65
    $region64: #{siglip_vit_forward.1} parent=1 // pred_region
      _
    $region65: #{siglip_vit_forward.1} parent=1 // pred_fallthru
      _
    // Predicated region
    $region66: #{siglip_vit_forward.1} parent=1 // pred_check
      _
    $region67: #{siglip_vit_forward.1} parent=1 // pred_check_branch
      %57 = sbr.rel (0) target = $region69
    $region68: #{siglip_vit_forward.1} parent=1 // pred_region
      _
    $region69: #{siglip_vit_forward.1} parent=1 // pred_fallthru
      _
    // Predicated region
    $region70: #{siglip_vit_forward.1} parent=1 // pred_check
      _
    $region71: #{siglip_vit_forward.1} parent=1 // pred_check_branch
      %59 = sbr.rel (0) target = $region73
    $region72: #{siglip_vit_forward.1} parent=1 // pred_region
      _
    $region73: #{siglip_vit_forward.1} parent=1 // pred_fallthru
      _
    %v61 = vld [vmem:[%s3] sm:$0xff]
    %v62 = vld [vmem:[%s0] sm:$0xff]
    %v63 = vld [vmem:[%s1] sm:$0xf]
    %v64 = vld [vmem:[%s1 + $0x4] sm:$0xf]
    %v65 = vld [vmem:[%s1 + $0x8] sm:$0xf]
    %v66 = vld [vmem:[%s1 + $0xc] sm:$0xf]
    %v67 = vld [vmem:[%s1 + $0x10] sm:$0xf]
    %v68 = vld [vmem:[%s1 + $0x14] sm:$0xf]
    %v69 = vld [vmem:[%s1 + $0x18] sm:$0xf]
    %v70 = vld [vmem:[%s1 + $0x1c] sm:$0xf]
    %v71 = vld [vmem:[%s1 + $0x20] sm:$0xf]
    %v72 = vld [vmem:[%s1 + $0x24] sm:$0xf]
    %v73 = vld [vmem:[%s1 + $0x28] sm:$0xf]
    %v74 = vld [vmem:[%s1 + $0x2c] sm:$0xf]
    %v75 = vld [vmem:[%s1 + $0x30] sm:$0xf]
    %v76 = vld [vmem:[%s1 + $0x34] sm:$0xf]
    %v77 = vld [vmem:[%s1 + $0x38] sm:$0xf]
    %v78 = vld [vmem:[%s1 + $0x3c] sm:$0xf]
    %v79 = vld [vmem:[%s1 + $0x40] sm:$0xf]
    %v80 = vld [vmem:[%s1 + $0x44] sm:$0xf]
    %v81 = vld [vmem:[%s1 + $0x48] sm:$0xf]
    %v82 = vld [vmem:[%s1 + $0x4c] sm:$0xf]
    %v83 = vld [vmem:[%s1 + $0x50] sm:$0xf]
    %v84 = vld [vmem:[%s1 + $0x54] sm:$0xf]
    %v85 = vld [vmem:[%s1 + $0x58] sm:$0xf]
    %v86 = vld [vmem:[%s1 + $0x5c] sm:$0xf]
    %v87 = vld [vmem:[%s2] sm:$0xff]
    %v89 = vunpack.c.l.b16 %v62
    %v90 = vunpack.c.h.b16 %v62
    %v91 = vpack.c.b16 %v89, %v89
    %v92 = vpack.c.b16 %v90, %v90
    %v118 = vunpack.c.l.b16 %v63
    %v119 = vunpack.c.l.b16 %v64
    %v120 = vunpack.c.l.b16 %v65
    %v121 = vunpack.c.l.b16 %v66
    %v122 = vunpack.c.l.b16 %v67
    %v123 = vunpack.c.l.b16 %v68
    %v124 = vunpack.c.l.b16 %v69
    %v125 = vunpack.c.l.b16 %v70
    %v126 = vunpack.c.l.b16 %v71
    %v127 = vunpack.c.l.b16 %v72
    %v128 = vunpack.c.l.b16 %v73
    %v129 = vunpack.c.l.b16 %v74
    %v130 = vunpack.c.l.b16 %v75
    %v131 = vunpack.c.l.b16 %v76
    %v132 = vunpack.c.l.b16 %v77
    %v133 = vunpack.c.l.b16 %v78
    %v134 = vunpack.c.l.b16 %v79
    %v135 = vunpack.c.l.b16 %v80
    %v136 = vunpack.c.l.b16 %v81
    %v137 = vunpack.c.l.b16 %v82
    %v138 = vunpack.c.l.b16 %v83
    %v139 = vunpack.c.l.b16 %v84
    %v140 = vunpack.c.l.b16 %v85
    %v141 = vunpack.c.l.b16 %v86
    %v142 = vpack.c.b16 %v119, %v118
    %v143 = vpack.c.b16 %v121, %v120
    %v144 = vpack.c.b16 %v123, %v122
    %v145 = vpack.c.b16 %v125, %v124
    %v146 = vpack.c.b16 %v127, %v126
    %v147 = vpack.c.b16 %v129, %v128
    %v148 = vpack.c.b16 %v131, %v130
    %v149 = vpack.c.b16 %v133, %v132
    %v150 = vpack.c.b16 %v135, %v134
    %v151 = vpack.c.b16 %v137, %v136
    %v152 = vpack.c.b16 %v139, %v138
    %v153 = vpack.c.b16 %v141, %v140
    %vm166 = vcmask 523264
    %v168 = vsel %vm166, %v92, 0
    %170 = vmatprep.subr.bf16.mxu0 0
    %171 = vmatpush1.bf16.msra.mxu0 %v149
    %172 = vmatprep.subr.bf16.mxu0 0
    %173 = vmatpush1.bf16.msra.mxu0 %v148
    %174 = vmatprep.subr.bf16.mxu0 0
    %175 = vmatpush1.bf16.msra.mxu0 %v147
    %176 = vmatprep.subr.bf16.mxu0 0
    %177 = vmatpush1.bf16.msra.mxu0 %v146
    %178 = vmatprep.subr.bf16.mxu0 0
    %179 = vmatpush1.bf16.msra.mxu0 %v145
    %180 = vmatprep.subr.bf16.mxu0 0
    %181 = vmatpush1.bf16.msra.mxu0 %v144
    %182 = vmatprep.subr.bf16.mxu0 0
    %183 = vmatpush1.bf16.msra.mxu0 %v143
    %184 = vmatprep.subr.bf16.mxu0 0
    %185 = vmatpush1.bf16.msra.mxu0 %v142
    %186 = vmatprep.subr.bf16.mxu0 0
    %187 = vmatpush2.bf16.msra.mxu0 0
    %188 = vmatprep.subr.bf16.mxu0 0
    %189 = vmatpush2.bf16.msra.mxu0 0
    %190 = vmatprep.subr.bf16.mxu0 0
    %191 = vmatpush2.bf16.msra.mxu0 0
    %192 = vmatprep.subr.bf16.mxu0 0
    %193 = vmatpush2.bf16.msra.mxu0 0
    %194 = vmatprep.subr.bf16.mxu0 0
    %195 = vmatpush2.bf16.msra.mxu0 %v153
    %196 = vmatprep.subr.bf16.mxu0 0
    %197 = vmatpush2.bf16.msra.mxu0 %v152
    %198 = vmatprep.subr.bf16.mxu0 0
    %199 = vmatpush2.bf16.msra.mxu0 %v151
    %200 = vmatprep.subr.bf16.mxu0 0
    %201 = vmatpush2.bf16.msra.mxu0 %v150
    %202 = vmatprep.mubr.bf16.mxu0 %v168
    %203 = vmatmul.mubr.bf16.gmra.mxu0 %v91
    %v204 = vpop.f32.mrf.mxu0
    %v205 = vadd.f32 %v87, %v204
    %v206 = vpop.f32.mrf.mxu0
    %v207 = vpop.f32.mrf.mxu0
    %v208 = vpop.f32.mrf.mxu0
    %209 = vdwg.mxu0
    %v210 = vld [vmem:[%s4] sm:$0x1]
    %v211 = vld [vmem:[%s5] sm:$0x1]
    %vm212 = vcmask 261120
    %v213 = vsel %vm212, %v205, 0.0
    %214 = vadd.xlane.f32.xlu0 %v213
    %v215 = vpop.xlane.xlu0 %214
    %v216 = vrcp.pop 32.0
    %v217 = vmul.f32 %v215, %v216
    %v218 = vsub.f32 %v205, %v217
    %v219 = vmul.f32 %v218, %v218
    %v220 = vsel %vm212, %v219, 0.0
    %221 = vadd.xlane.f32.xlu0 %v220
    %v222 = vpop.xlane.xlu0 %221
    %v223 = vmul.f32 %v222, %v216
    %v224 = vadd.f32 %v223, 1e-06
    %v225 = vrsqrt.pop %v224
    %v226 = vmul.f32 %v218, %v225
    %v228 = vlaneseq
    %v229 = vshrl.u32 %v228, 7
    %v230 = vsub.s32 0, %v229
    %v231 = vrot.slane %v210, %v230
    %v233 = vmul.f32 %v226, %v231
    %v235 = vlaneseq
    %v236 = vshrl.u32 %v235, 7
    %v237 = vsub.s32 0, %v236
    %v238 = vrot.slane %v211, %v237
    %v240 = vadd.f32 %v233, %v238
    %v241 = vpack.c.bf16 %v240, %v240
    %v242 = vld [vmem:[%s6] sm:$0xf]
    %v243 = vld [vmem:[%s6 + $0x4] sm:$0xf]
    %v244 = vld [vmem:[%s6 + $0x8] sm:$0xf]
    %v245 = vld [vmem:[%s6 + $0xc] sm:$0xf]
    %v246 = vld [vmem:[%s7] sm:$0x1]
    %v248 = vlaneseq
    %v249 = vshrl.u32 %v248, 7
    %v250 = vsub.s32 0, %v249
    %v251 = vrot.slane %v246, %v250
    %v257 = vunpack.c.l.b16 %v242
    %v258 = vunpack.c.l.b16 %v243
    %v259 = vunpack.c.l.b16 %v244
    %v260 = vunpack.c.l.b16 %v245
    %v261 = vpack.c.b16 %v258, %v257
    %v262 = vpack.c.b16 %v260, %v259
    %v266 = vsel %vm212, %v241, 0
    %268 = vmatprep.subr.bf16.mxu0 0
    %269 = vmatpush1.bf16.msra.mxu0 0
    %270 = vmatprep.subr.bf16.mxu0 0
    %271 = vmatpush1.bf16.msra.mxu0 0
    %272 = vmatprep.subr.bf16.mxu0 0
    %273 = vmatpush1.bf16.msra.mxu0 0
    %274 = vmatprep.subr.bf16.mxu0 0
    %275 = vmatpush1.bf16.msra.mxu0 0
    %276 = vmatprep.subr.bf16.mxu0 0
    %277 = vmatpush1.bf16.msra.mxu0 0
    %278 = vmatprep.subr.bf16.mxu0 0
    %279 = vmatpush1.bf16.msra.mxu0 0
    %280 = vmatprep.subr.bf16.mxu0 0
    %281 = vmatpush1.bf16.msra.mxu0 %v262
    %282 = vmatprep.subr.bf16.mxu0 0
    %283 = vmatpush1.bf16.msra.mxu0 %v261
    %284 = vmatprep.subr.bf16.mxu0 0
    %285 = vmatpush2.bf16.msra.mxu0 0
    %286 = vmatprep.subr.bf16.mxu0 0
    %287 = vmatpush2.bf16.msra.mxu0 0
    %288 = vmatprep.subr.bf16.mxu0 0
    %289 = vmatpush2.bf16.msra.mxu0 0
    %290 = vmatprep.subr.bf16.mxu0 0
    %291 = vmatpush2.bf16.msra.mxu0 0
    %292 = vmatprep.subr.bf16.mxu0 0
    %293 = vmatpush2.bf16.msra.mxu0 0
    %294 = vmatprep.subr.bf16.mxu0 0
    %295 = vmatpush2.bf16.msra.mxu0 0
    %296 = vmatprep.subr.bf16.mxu0 0
    %297 = vmatpush2.bf16.msra.mxu0 0
    %298 = vmatprep.subr.bf16.mxu0 0
    %299 = vmatpush2.bf16.msra.mxu0 0
    %300 = vmatprep.mubr.bf16.mxu0 0
    %301 = vmatmul.mubr.bf16.gmra.mxu0 %v266
    %v302 = vpop.f32.mrf.mxu0
    %v303 = vadd.f32 %v251, %v302
    %v304 = vpop.f32.mrf.mxu0
    %v305 = vpop.f32.mrf.mxu0
    %v306 = vpop.f32.mrf.mxu0
    %307 = vdwg.mxu0
    %v308 = vpack.c.bf16 %v303, %v303
    %310 = vrot.lane.b32.xlu0 %v308, 96
    %v311 = vpop.permute.xlu0 %310
    %vm312 = vcmask 130048
    %v314 = vsel %vm312, %v308, 0
    %v317 = vsel %vm312, %v311, 0
    %319 = vmatprep.subr.bf16.mxu0 0
    %320 = vmatpush1.bf16.xpose.msra.mxu0 0
    %321 = vmatprep.subr.bf16.mxu0 0
    %322 = vmatpush1.bf16.xpose.msra.mxu0 0
    %323 = vmatprep.subr.bf16.mxu0 0
    %324 = vmatpush1.bf16.xpose.msra.mxu0 0
    %325 = vmatprep.subr.bf16.mxu0 0
    %326 = vmatpush1.bf16.xpose.msra.mxu0 0
    %327 = vmatprep.subr.bf16.mxu0 0
    %328 = vmatpush1.bf16.xpose.msra.mxu0 0
    %329 = vmatprep.subr.bf16.mxu0 0
    %330 = vmatpush1.bf16.xpose.msra.mxu0 0
    %331 = vmatprep.subr.bf16.mxu0 0
    %332 = vmatpush1.bf16.xpose.msra.mxu0 0
    %333 = vmatprep.subr.bf16.mxu0 0
    %334 = vmatpush1.bf16.xpose.msra.mxu0 %v317
    %335 = vmatprep.subr.bf16.mxu0 0
    %336 = vmatpush2.bf16.xpose.msra.mxu0 0
    %337 = vmatprep.subr.bf16.mxu0 0
    %338 = vmatpush2.bf16.xpose.msra.mxu0 0
    %339 = vmatprep.subr.bf16.mxu0 0
    %340 = vmatpush2.bf16.xpose.msra.mxu0 0
    %341 = vmatprep.subr.bf16.mxu0 0
    %342 = vmatpush2.bf16.xpose.msra.mxu0 0
    %343 = vmatprep.subr.bf16.mxu0 0
    %344 = vmatpush2.bf16.xpose.msra.mxu0 0
    %345 = vmatprep.subr.bf16.mxu0 0
    %346 = vmatpush2.bf16.xpose.msra.mxu0 0
    %347 = vmatprep.subr.bf16.mxu0 0
    %348 = vmatpush2.bf16.xpose.msra.mxu0 0
    %349 = vmatprep.subr.bf16.mxu0 0
    %350 = vmatpush2.bf16.xpose.msra.mxu0 0
    %351 = vmatprep.mubr.bf16.mxu0 0
    %352 = vmatmul.mubr.bf16.gmra.mxu0 %v314
    %v353 = vpop.f32.mrf.mxu0
    %v354 = vadd.f32 %v61, %v353
    %v355 = vpop.f32.mrf.mxu0
    %v356 = vpop.f32.mrf.mxu0
    %v357 = vpop.f32.mrf.mxu0
    %358 = vdwg.mxu0
    %vm359 = vcmask 64512
    %v360 = vsel %vm359, %v354, -inf
    %361 = vmax.xlane.f32.xlu0 %v360
    %v362 = vpop.xlane.xlu0 %361
    %v363 = vsub.f32 %v354, %v362
    %v364 = vmul.f32 %v363, 1.442695
    %v365 = vpow.pop %v364
    %v366 = vsel %vm359, %v365, 0.0
    %367 = vadd.xlane.f32.xlu0 %v366
    %v368 = vpop.xlane.xlu0 %367
    %v369 = vrcp.pop %v368
    %v370 = vmul.f32 %v365, %v369
    %v371 = vpack.c.bf16 %v370, %v370
    %372 = vrot.lane.b32.xlu0 %v308, 64
    %v373 = vpop.permute.xlu0 %372
    %v375 = vsel %vm359, %v371, 0
    %vm377 = vcmask 1043456
    %v379 = vsel %vm377, %v373, 0
    %381 = vmatprep.subr.bf16.mxu0 0
    %382 = vmatpush1.bf16.msra.mxu0 0
    %383 = vmatprep.subr.bf16.mxu0 0
    %384 = vmatpush1.bf16.msra.mxu0 0
    %385 = vmatprep.subr.bf16.mxu0 0
    %386 = vmatpush1.bf16.msra.mxu0 0
    %387 = vmatprep.subr.bf16.mxu0 0
    %388 = vmatpush1.bf16.msra.mxu0 0
    %389 = vmatprep.subr.bf16.mxu0 0
    %390 = vmatpush1.bf16.msra.mxu0 0
    %391 = vmatprep.subr.bf16.mxu0 0
    %392 = vmatpush1.bf16.msra.mxu0 0
    %393 = vmatprep.subr.bf16.mxu0 0
    %394 = vmatpush1.bf16.msra.mxu0 0
    %395 = vmatprep.subr.bf16.mxu0 0
    %396 = vmatpush1.bf16.msra.mxu0 %v379
    %397 = vmatprep.subr.bf16.mxu0 0
    %398 = vmatpush2.bf16.msra.mxu0 0
    %399 = vmatprep.subr.bf16.mxu0 0
    %400 = vmatpush2.bf16.msra.mxu0 0
    %401 = vmatprep.subr.bf16.mxu0 0
    %402 = vmatpush2.bf16.msra.mxu0 0
    %403 = vmatprep.subr.bf16.mxu0 0
    %404 = vmatpush2.bf16.msra.mxu0 0
    %405 = vmatprep.subr.bf16.mxu0 0
    %406 = vmatpush2.bf16.msra.mxu0 0
    %407 = vmatprep.subr.bf16.mxu0 0
    %408 = vmatpush2.bf16.msra.mxu0 0
    %409 = vmatprep.subr.bf16.mxu0 0
    %410 = vmatpush2.bf16.msra.mxu0 0
    %411 = vmatprep.subr.bf16.mxu0 0
    %412 = vmatpush2.bf16.msra.mxu0 0
    %413 = vmatprep.mubr.bf16.mxu0 0
    %414 = vmatmul.mubr.bf16.gmra.mxu0 %v375
    %v415 = vpop.f32.mrf.mxu0
    %v416 = vadd.f32 0.0, %v415
    %v417 = vpop.f32.mrf.mxu0
    %v418 = vpop.f32.mrf.mxu0
    %v419 = vpop.f32.mrf.mxu0
    %420 = vdwg.mxu0
    %421 = vrot.lane.b32.xlu0 %v308, 112
    %v422 = vpop.permute.xlu0 %421
    %423 = vrot.lane.b32.xlu0 %v308, 80
    %v424 = vpop.permute.xlu0 %423
    %v426 = vsel %vm312, %v422, 0
    %v429 = vsel %vm312, %v424, 0
    %431 = vmatprep.subr.bf16.mxu0 0
    %432 = vmatpush1.bf16.xpose.msra.mxu0 0
    %433 = vmatprep.subr.bf16.mxu0 0
    %434 = vmatpush1.bf16.xpose.msra.mxu0 0
    %435 = vmatprep.subr.bf16.mxu0 0
    %436 = vmatpush1.bf16.xpose.msra.mxu0 0
    %437 = vmatprep.subr.bf16.mxu0 0
    %438 = vmatpush1.bf16.xpose.msra.mxu0 0
    %439 = vmatprep.subr.bf16.mxu0 0
    %440 = vmatpush1.bf16.xpose.msra.mxu0 0
    %441 = vmatprep.subr.bf16.mxu0 0
    %442 = vmatpush1.bf16.xpose.msra.mxu0 0
    %443 = vmatprep.subr.bf16.mxu0 0
    %444 = vmatpush1.bf16.xpose.msra.mxu0 0
    %445 = vmatprep.subr.bf16.mxu0 0
    %446 = vmatpush1.bf16.xpose.msra.mxu0 %v429
    %447 = vmatprep.subr.bf16.mxu0 0
    %448 = vmatpush2.bf16.xpose.msra.mxu0 0
    %449 = vmatprep.subr.bf16.mxu0 0
    %450 = vmatpush2.bf16.xpose.msra.mxu0 0
    %451 = vmatprep.subr.bf16.mxu0 0
    %452 = vmatpush2.bf16.xpose.msra.mxu0 0
    %453 = vmatprep.subr.bf16.mxu0 0
    %454 = vmatpush2.bf16.xpose.msra.mxu0 0
    %455 = vmatprep.subr.bf16.mxu0 0
    %456 = vmatpush2.bf16.xpose.msra.mxu0 0
    %457 = vmatprep.subr.bf16.mxu0 0
    %458 = vmatpush2.bf16.xpose.msra.mxu0 0
    %459 = vmatprep.subr.bf16.mxu0 0
    %460 = vmatpush2.bf16.xpose.msra.mxu0 0
    %461 = vmatprep.subr.bf16.mxu0 0
    %462 = vmatpush2.bf16.xpose.msra.mxu0 0
    %463 = vmatprep.mubr.bf16.mxu0 0
    %464 = vmatmul.mubr.bf16.gmra.mxu0 %v426
    %v465 = vpop.f32.mrf.mxu0
    %v466 = vadd.f32 %v61, %v465
    %v467 = vpop.f32.mrf.mxu0
    %v468 = vpop.f32.mrf.mxu0
    %v469 = vpop.f32.mrf.mxu0
    %470 = vdwg.mxu0
    %v471 = vsel %vm359, %v466, -inf
    %472 = vmax.xlane.f32.xlu0 %v471
    %v473 = vpop.xlane.xlu0 %472
    %v474 = vsub.f32 %v466, %v473
    %v475 = vmul.f32 %v474, 1.442695
    %v476 = vpow.pop %v475
    %v477 = vsel %vm359, %v476, 0.0
    %478 = vadd.xlane.f32.xlu0 %v477
    %v479 = vpop.xlane.xlu0 %478
    %v480 = vrcp.pop %v479
    %v481 = vmul.f32 %v476, %v480
    %v482 = vpack.c.bf16 %v481, %v481
    %483 = vrot.lane.b32.xlu0 %v308, 48
    %v484 = vpop.permute.xlu0 %483
    %v486 = vsel %vm359, %v482, 0
    %v489 = vsel %vm377, %v484, 0
    %491 = vmatprep.subr.bf16.mxu0 0
    %492 = vmatpush1.bf16.msra.mxu0 0
    %493 = vmatprep.subr.bf16.mxu0 0
    %494 = vmatpush1.bf16.msra.mxu0 0
    %495 = vmatprep.subr.bf16.mxu0 0
    %496 = vmatpush1.bf16.msra.mxu0 0
    %497 = vmatprep.subr.bf16.mxu0 0
    %498 = vmatpush1.bf16.msra.mxu0 0
    %499 = vmatprep.subr.bf16.mxu0 0
    %500 = vmatpush1.bf16.msra.mxu0 0
    %501 = vmatprep.subr.bf16.mxu0 0
    %502 = vmatpush1.bf16.msra.mxu0 0
    %503 = vmatprep.subr.bf16.mxu0 0
    %504 = vmatpush1.bf16.msra.mxu0 0
    %505 = vmatprep.subr.bf16.mxu0 0
    %506 = vmatpush1.bf16.msra.mxu0 %v489
    %507 = vmatprep.subr.bf16.mxu0 0
    %508 = vmatpush2.bf16.msra.mxu0 0
    %509 = vmatprep.subr.bf16.mxu0 0
    %510 = vmatpush2.bf16.msra.mxu0 0
    %511 = vmatprep.subr.bf16.mxu0 0
    %512 = vmatpush2.bf16.msra.mxu0 0
    %513 = vmatprep.subr.bf16.mxu0 0
    %514 = vmatpush2.bf16.msra.mxu0 0
    %515 = vmatprep.subr.bf16.mxu0 0
    %516 = vmatpush2.bf16.msra.mxu0 0
    %517 = vmatprep.subr.bf16.mxu0 0
    %518 = vmatpush2.bf16.msra.mxu0 0
    %519 = vmatprep.subr.bf16.mxu0 0
    %520 = vmatpush2.bf16.msra.mxu0 0
    %521 = vmatprep.subr.bf16.mxu0 0
    %522 = vmatpush2.bf16.msra.mxu0 0
    %523 = vmatprep.mubr.bf16.mxu0 0
    %524 = vmatmul.mubr.bf16.gmra.mxu0 %v486
    %v525 = vpop.f32.mrf.mxu0
    %v526 = vadd.f32 0.0, %v525
    %v527 = vpop.f32.mrf.mxu0
    %v528 = vpop.f32.mrf.mxu0
    %v529 = vpop.f32.mrf.mxu0
    %530 = vdwg.mxu0
    %532 = vrot.lane.b32.xlu0 %v526, 16
    %v533 = vpop.permute.xlu0 %532
    %v535 = vsel %vm312, %v416, %v533
    %v536 = vpack.c.bf16 %v535, %v535
    %v537 = vld [vmem:[%s8] sm:$0xf]
    %v538 = vld [vmem:[%s8 + $0x4] sm:$0xf]
    %v539 = vld [vmem:[%s8 + $0x8] sm:$0xf]
    %v540 = vld [vmem:[%s8 + $0xc] sm:$0xf]
    %v545 = vunpack.c.l.b16 %v537
    %v546 = vunpack.c.l.b16 %v538
    %v547 = vunpack.c.l.b16 %v539
    %v548 = vunpack.c.l.b16 %v540
    %v549 = vpack.c.b16 %v546, %v545
    %v550 = vpack.c.b16 %v548, %v547
    %v554 = vsel %vm212, %v536, 0
    %556 = vmatprep.subr.bf16.mxu0 0
    %557 = vmatpush1.bf16.msra.mxu0 0
    %558 = vmatprep.subr.bf16.mxu0 0
    %559 = vmatpush1.bf16.msra.mxu0 0
    %560 = vmatprep.subr.bf16.mxu0 0
    %561 = vmatpush1.bf16.msra.mxu0 0
    %562 = vmatprep.subr.bf16.mxu0 0
    %563 = vmatpush1.bf16.msra.mxu0 0
    %564 = vmatprep.subr.bf16.mxu0 0
    %565 = vmatpush1.bf16.msra.mxu0 0
    %566 = vmatprep.subr.bf16.mxu0 0
    %567 = vmatpush1.bf16.msra.mxu0 0
    %568 = vmatprep.subr.bf16.mxu0 0
    %569 = vmatpush1.bf16.msra.mxu0 %v550
    %570 = vmatprep.subr.bf16.mxu0 0
    %571 = vmatpush1.bf16.msra.mxu0 %v549
    %572 = vmatprep.subr.bf16.mxu0 0
    %573 = vmatpush2.bf16.msra.mxu0 0
    %574 = vmatprep.subr.bf16.mxu0 0
    %575 = vmatpush2.bf16.msra.mxu0 0
    %576 = vmatprep.subr.bf16.mxu0 0
    %577 = vmatpush2.bf16.msra.mxu0 0
    %578 = vmatprep.subr.bf16.mxu0 0
    %579 = vmatpush2.bf16.msra.mxu0 0
    %580 = vmatprep.subr.bf16.mxu0 0
    %581 = vmatpush2.bf16.msra.mxu0 0
    %582 = vmatprep.subr.bf16.mxu0 0
    %583 = vmatpush2.bf16.msra.mxu0 0
    %584 = vmatprep.subr.bf16.mxu0 0
    %585 = vmatpush2.bf16.msra.mxu0 0
    %586 = vmatprep.subr.bf16.mxu0 0
    %587 = vmatpush2.bf16.msra.mxu0 0
    %588 = vmatprep.mubr.bf16.mxu0 0
    %589 = vmatmul.mubr.bf16.gmra.mxu0 %v554
    %v590 = vpop.f32.mrf.mxu0
    %v591 = vadd.f32 0.0, %v590
    %v592 = vpop.f32.mrf.mxu0
    %v593 = vpop.f32.mrf.mxu0
    %v594 = vpop.f32.mrf.mxu0
    %595 = vdwg.mxu0
    %v596 = vadd.f32 %v205, %v591
    %v597 = vld [vmem:[%s9] sm:$0x1]
    %v599 = vlaneseq
    %v600 = vshrl.u32 %v599, 7
    %v601 = vsub.s32 0, %v600
    %v602 = vrot.slane %v597, %v601
    %v604 = vadd.f32 %v596, %v602
    %v605 = vld [vmem:[%s10] sm:$0x1]
    %v606 = vld [vmem:[%s11] sm:$0x1]
    %v607 = vsel %vm212, %v604, 0.0
    %608 = vadd.xlane.f32.xlu0 %v607
    %v609 = vpop.xlane.xlu0 %608
    %v610 = vmul.f32 %v609, %v216
    %v611 = vsub.f32 %v604, %v610
    %v612 = vmul.f32 %v611, %v611
    %v613 = vsel %vm212, %v612, 0.0
    %614 = vadd.xlane.f32.xlu0 %v613
    %v615 = vpop.xlane.xlu0 %614
    %v616 = vmul.f32 %v615, %v216
    %v617 = vadd.f32 %v616, 1e-06
    %v618 = vrsqrt.pop %v617
    %v619 = vmul.f32 %v611, %v618
    %v621 = vlaneseq
    %v622 = vshrl.u32 %v621, 7
    %v623 = vsub.s32 0, %v622
    %v624 = vrot.slane %v605, %v623
    %v626 = vmul.f32 %v619, %v624
    %v628 = vlaneseq
    %v629 = vshrl.u32 %v628, 7
    %v630 = vsub.s32 0, %v629
    %v631 = vrot.slane %v606, %v630
    %v633 = vadd.f32 %v626, %v631
    %v634 = vpack.c.bf16 %v633, %v633
    %v635 = vld [vmem:[%s12] sm:$0xf]
    %v636 = vld [vmem:[%s12 + $0x4] sm:$0xf]
    %v637 = vld [vmem:[%s12 + $0x8] sm:$0xf]
    %v638 = vld [vmem:[%s12 + $0xc] sm:$0xf]
    %v639 = vld [vmem:[%s13] sm:$0x1]
    %v641 = vlaneseq
    %v642 = vshrl.u32 %v641, 7
    %v643 = vsub.s32 0, %v642
    %v644 = vrot.slane %v639, %v643
    %v650 = vunpack.c.l.b16 %v635
    %v651 = vunpack.c.l.b16 %v636
    %v652 = vunpack.c.l.b16 %v637
    %v653 = vunpack.c.l.b16 %v638
    %v654 = vpack.c.b16 %v651, %v650
    %v655 = vpack.c.b16 %v653, %v652
    %v659 = vsel %vm212, %v634, 0
    %661 = vmatprep.subr.bf16.mxu0 0
    %662 = vmatpush1.bf16.msra.mxu0 0
    %663 = vmatprep.subr.bf16.mxu0 0
    %664 = vmatpush1.bf16.msra.mxu0 0
    %665 = vmatprep.subr.bf16.mxu0 0
    %666 = vmatpush1.bf16.msra.mxu0 0
    %667 = vmatprep.subr.bf16.mxu0 0
    %668 = vmatpush1.bf16.msra.mxu0 0
    %669 = vmatprep.subr.bf16.mxu0 0
    %670 = vmatpush1.bf16.msra.mxu0 0
    %671 = vmatprep.subr.bf16.mxu0 0
    %672 = vmatpush1.bf16.msra.mxu0 0
    %673 = vmatprep.subr.bf16.mxu0 0
    %674 = vmatpush1.bf16.msra.mxu0 %v655
    %675 = vmatprep.subr.bf16.mxu0 0
    %676 = vmatpush1.bf16.msra.mxu0 %v654
    %677 = vmatprep.subr.bf16.mxu0 0
    %678 = vmatpush2.bf16.msra.mxu0 0
    %679 = vmatprep.subr.bf16.mxu0 0
    %680 = vmatpush2.bf16.msra.mxu0 0
    %681 = vmatprep.subr.bf16.mxu0 0
    %682 = vmatpush2.bf16.msra.mxu0 0
    %683 = vmatprep.subr.bf16.mxu0 0
    %684 = vmatpush2.bf16.msra.mxu0 0
    %685 = vmatprep.subr.bf16.mxu0 0
    %686 = vmatpush2.bf16.msra.mxu0 0
    %687 = vmatprep.subr.bf16.mxu0 0
    %688 = vmatpush2.bf16.msra.mxu0 0
    %689 = vmatprep.subr.bf16.mxu0 0
    %690 = vmatpush2.bf16.msra.mxu0 0
    %691 = vmatprep.subr.bf16.mxu0 0
    %692 = vmatpush2.bf16.msra.mxu0 0
    %693 = vmatprep.mubr.bf16.mxu0 0
    %694 = vmatmul.mubr.bf16.gmra.mxu0 %v659
    %v695 = vpop.f32.mrf.mxu0
    %v696 = vadd.f32 %v644, %v695
    %v697 = vpop.f32.mrf.mxu0
    %v698 = vpop.f32.mrf.mxu0
    %v699 = vpop.f32.mrf.mxu0
    %700 = vdwg.mxu0
    %v701 = vmul.f32 %v696, 0.5
    %v702 = vmul.f32 %v696, 0.044715
    %v703 = vmul.f32 %v702, %v696
    %v704 = vmul.f32 %v703, %v696
    %v705 = vadd.f32 %v696, %v704
    %v706 = vmul.f32 %v705, 0.7978846
    %v707 = vtanh.pop %v706
    %v708 = vadd.f32 %v707, 1.0
    %v709 = vmul.f32 %v701, %v708
    %v710 = vpack.c.bf16 %v709, %v709
    %v711 = vld [vmem:[%s14] sm:$0xf]
    %v712 = vld [vmem:[%s14 + $0x4] sm:$0xf]
    %v713 = vld [vmem:[%s14 + $0x8] sm:$0xf]
    %v714 = vld [vmem:[%s14 + $0xc] sm:$0xf]
    %v715 = vld [vmem:[%s14 + $0x10] sm:$0xf]
    %v716 = vld [vmem:[%s14 + $0x14] sm:$0xf]
    %v717 = vld [vmem:[%s14 + $0x18] sm:$0xf]
    %v718 = vld [vmem:[%s14 + $0x1c] sm:$0xf]
    %v727 = vunpack.c.l.b16 %v711
    %v728 = vunpack.c.l.b16 %v712
    %v729 = vunpack.c.l.b16 %v713
    %v730 = vunpack.c.l.b16 %v714
    %v731 = vunpack.c.l.b16 %v715
    %v732 = vunpack.c.l.b16 %v716
    %v733 = vunpack.c.l.b16 %v717
    %v734 = vunpack.c.l.b16 %v718
    %v735 = vpack.c.b16 %v728, %v727
    %v736 = vpack.c.b16 %v730, %v729
    %v737 = vpack.c.b16 %v732, %v731
    %v738 = vpack.c.b16 %v734, %v733
    %v744 = vsel %vm166, %v710, 0
    %746 = vmatprep.subr.bf16.mxu0 0
    %747 = vmatpush1.bf16.msra.mxu0 0
    %748 = vmatprep.subr.bf16.mxu0 0
    %749 = vmatpush1.bf16.msra.mxu0 0
    %750 = vmatprep.subr.bf16.mxu0 0
    %751 = vmatpush1.bf16.msra.mxu0 0
    %752 = vmatprep.subr.bf16.mxu0 0
    %753 = vmatpush1.bf16.msra.mxu0 0
    %754 = vmatprep.subr.bf16.mxu0 0
    %755 = vmatpush1.bf16.msra.mxu0 %v738
    %756 = vmatprep.subr.bf16.mxu0 0
    %757 = vmatpush1.bf16.msra.mxu0 %v737
    %758 = vmatprep.subr.bf16.mxu0 0
    %759 = vmatpush1.bf16.msra.mxu0 %v736
    %760 = vmatprep.subr.bf16.mxu0 0
    %761 = vmatpush1.bf16.msra.mxu0 %v735
    %762 = vmatprep.subr.bf16.mxu0 0
    %763 = vmatpush2.bf16.msra.mxu0 0
    %764 = vmatprep.subr.bf16.mxu0 0
    %765 = vmatpush2.bf16.msra.mxu0 0
    %766 = vmatprep.subr.bf16.mxu0 0
    %767 = vmatpush2.bf16.msra.mxu0 0
    %768 = vmatprep.subr.bf16.mxu0 0
    %769 = vmatpush2.bf16.msra.mxu0 0
    %770 = vmatprep.subr.bf16.mxu0 0
    %771 = vmatpush2.bf16.msra.mxu0 0
    %772 = vmatprep.subr.bf16.mxu0 0
    %773 = vmatpush2.bf16.msra.mxu0 0
    %774 = vmatprep.subr.bf16.mxu0 0
    %775 = vmatpush2.bf16.msra.mxu0 0
    %776 = vmatprep.subr.bf16.mxu0 0
    %777 = vmatpush2.bf16.msra.mxu0 0
    %778 = vmatprep.mubr.bf16.mxu0 0
    %779 = vmatmul.mubr.bf16.gmra.mxu0 %v744
    %v780 = vpop.f32.mrf.mxu0
    %v781 = vadd.f32 0.0, %v780
    %v782 = vpop.f32.mrf.mxu0
    %v783 = vpop.f32.mrf.mxu0
    %v784 = vpop.f32.mrf.mxu0
    %785 = vdwg.mxu0
    %v786 = vadd.f32 %v604, %v781
    %v787 = vld [vmem:[%s15] sm:$0x1]
    %v789 = vlaneseq
    %v790 = vshrl.u32 %v789, 7
    %v791 = vsub.s32 0, %v790
    %v792 = vrot.slane %v787, %v791
    %v794 = vadd.f32 %v786, %v792
    %s795 = scalar_lea.vmem %s4, 1
    %v796 = vld [vmem:[%s795] sm:$0x1]
    %s797 = scalar_lea.vmem %s5, 1
    %v798 = vld [vmem:[%s797] sm:$0x1]
    %v799 = vsel %vm212, %v794, 0.0
    %800 = vadd.xlane.f32.xlu0 %v799
    %v801 = vpop.xlane.xlu0 %800
    %v802 = vmul.f32 %v801, %v216
    %v803 = vsub.f32 %v794, %v802
    %v804 = vmul.f32 %v803, %v803
    %v805 = vsel %vm212, %v804, 0.0
    %806 = vadd.xlane.f32.xlu0 %v805
    %v807 = vpop.xlane.xlu0 %806
    %v808 = vmul.f32 %v807, %v216
    %v809 = vadd.f32 %v808, 1e-06
    %v810 = vrsqrt.pop %v809
    %v811 = vmul.f32 %v803, %v810
    %v813 = vlaneseq
    %v814 = vshrl.u32 %v813, 7
    %v815 = vsub.s32 0, %v814
    %v816 = vrot.slane %v796, %v815
    %v818 = vmul.f32 %v811, %v816
    %v820 = vlaneseq
    %v821 = vshrl.u32 %v820, 7
    %v822 = vsub.s32 0, %v821
    %v823 = vrot.slane %v798, %v822
    %v825 = vadd.f32 %v818, %v823
    %v826 = vpack.c.bf16 %v825, %v825
    %s827 = scalar_lea.vmem %s6, 16
    %v828 = vld [vmem:[%s827] sm:$0xf]
    %v829 = vld [vmem:[%s827 + $0x4] sm:$0xf]
    %v830 = vld [vmem:[%s827 + $0x8] sm:$0xf]
    %v831 = vld [vmem:[%s827 + $0xc] sm:$0xf]
    %s832 = scalar_lea.vmem %s7, 1
    %v833 = vld [vmem:[%s832] sm:$0x1]
    %v835 = vlaneseq
    %v836 = vshrl.u32 %v835, 7
    %v837 = vsub.s32 0, %v836
    %v838 = vrot.slane %v833, %v837
    %v844 = vunpack.c.l.b16 %v828
    %v845 = vunpack.c.l.b16 %v829
    %v846 = vunpack.c.l.b16 %v830
    %v847 = vunpack.c.l.b16 %v831
    %v848 = vpack.c.b16 %v845, %v844
    %v849 = vpack.c.b16 %v847, %v846
    %v853 = vsel %vm212, %v826, 0
    %855 = vmatprep.subr.bf16.mxu0 0
    %856 = vmatpush1.bf16.msra.mxu0 0
    %857 = vmatprep.subr.bf16.mxu0 0
    %858 = vmatpush1.bf16.msra.mxu0 0
    %859 = vmatprep.subr.bf16.mxu0 0
    %860 = vmatpush1.bf16.msra.mxu0 0
    %861 = vmatprep.subr.bf16.mxu0 0
    %862 = vmatpush1.bf16.msra.mxu0 0
    %863 = vmatprep.subr.bf16.mxu0 0
    %864 = vmatpush1.bf16.msra.mxu0 0
    %865 = vmatprep.subr.bf16.mxu0 0
    %866 = vmatpush1.bf16.msra.mxu0 0
    %867 = vmatprep.subr.bf16.mxu0 0
    %868 = vmatpush1.bf16.msra.mxu0 %v849
    %869 = vmatprep.subr.bf16.mxu0 0
    %870 = vmatpush1.bf16.msra.mxu0 %v848
    %871 = vmatprep.subr.bf16.mxu0 0
    %872 = vmatpush2.bf16.msra.mxu0 0
    %873 = vmatprep.subr.bf16.mxu0 0
    %874 = vmatpush2.bf16.msra.mxu0 0
    %875 = vmatprep.subr.bf16.mxu0 0
    %876 = vmatpush2.bf16.msra.mxu0 0
    %877 = vmatprep.subr.bf16.mxu0 0
    %878 = vmatpush2.bf16.msra.mxu0 0
    %879 = vmatprep.subr.bf16.mxu0 0
    %880 = vmatpush2.bf16.msra.mxu0 0
    %881 = vmatprep.subr.bf16.mxu0 0
    %882 = vmatpush2.bf16.msra.mxu0 0
    %883 = vmatprep.subr.bf16.mxu0 0
    %884 = vmatpush2.bf16.msra.mxu0 0
    %885 = vmatprep.subr.bf16.mxu0 0
    %886 = vmatpush2.bf16.msra.mxu0 0
    %887 = vmatprep.mubr.bf16.mxu0 0
    %888 = vmatmul.mubr.bf16.gmra.mxu0 %v853
    %v889 = vpop.f32.mrf.mxu0
    %v890 = vadd.f32 %v838, %v889
    %v891 = vpop.f32.mrf.mxu0
    %v892 = vpop.f32.mrf.mxu0
    %v893 = vpop.f32.mrf.mxu0
    %894 = vdwg.mxu0
    %v895 = vpack.c.bf16 %v890, %v890
    %897 = vrot.lane.b32.xlu0 %v895, 96
    %v898 = vpop.permute.xlu0 %897
    %v900 = vsel %vm312, %v895, 0
    %v903 = vsel %vm312, %v898, 0
    %905 = vmatprep.subr.bf16.mxu0 0
    %906 = vmatpush1.bf16.xpose.msra.mxu0 0
    %907 = vmatprep.subr.bf16.mxu0 0
    %908 = vmatpush1.bf16.xpose.msra.mxu0 0
    %909 = vmatprep.subr.bf16.mxu0 0
    %910 = vmatpush1.bf16.xpose.msra.mxu0 0
    %911 = vmatprep.subr.bf16.mxu0 0
    %912 = vmatpush1.bf16.xpose.msra.mxu0 0
    %913 = vmatprep.subr.bf16.mxu0 0
    %914 = vmatpush1.bf16.xpose.msra.mxu0 0
    %915 = vmatprep.subr.bf16.mxu0 0
    %916 = vmatpush1.bf16.xpose.msra.mxu0 0
    %917 = vmatprep.subr.bf16.mxu0 0
    %918 = vmatpush1.bf16.xpose.msra.mxu0 0
    %919 = vmatprep.subr.bf16.mxu0 0
    %920 = vmatpush1.bf16.xpose.msra.mxu0 %v903
    %921 = vmatprep.subr.bf16.mxu0 0
    %922 = vmatpush2.bf16.xpose.msra.mxu0 0
    %923 = vmatprep.subr.bf16.mxu0 0
    %924 = vmatpush2.bf16.xpose.msra.mxu0 0
    %925 = vmatprep.subr.bf16.mxu0 0
    %926 = vmatpush2.bf16.xpose.msra.mxu0 0
    %927 = vmatprep.subr.bf16.mxu0 0
    %928 = vmatpush2.bf16.xpose.msra.mxu0 0
    %929 = vmatprep.subr.bf16.mxu0 0
    %930 = vmatpush2.bf16.xpose.msra.mxu0 0
    %931 = vmatprep.subr.bf16.mxu0 0
    %932 = vmatpush2.bf16.xpose.msra.mxu0 0
    %933 = vmatprep.subr.bf16.mxu0 0
    %934 = vmatpush2.bf16.xpose.msra.mxu0 0
    %935 = vmatprep.subr.bf16.mxu0 0
    %936 = vmatpush2.bf16.xpose.msra.mxu0 0
    %937 = vmatprep.mubr.bf16.mxu0 0
    %938 = vmatmul.mubr.bf16.gmra.mxu0 %v900
    %v939 = vpop.f32.mrf.mxu0
    %v940 = vadd.f32 %v61, %v939
    %v941 = vpop.f32.mrf.mxu0
    %v942 = vpop.f32.mrf.mxu0
    %v943 = vpop.f32.mrf.mxu0
    %944 = vdwg.mxu0
    %v945 = vsel %vm359, %v940, -inf
    %946 = vmax.xlane.f32.xlu0 %v945
    %v947 = vpop.xlane.xlu0 %946
    %v948 = vsub.f32 %v940, %v947
    %v949 = vmul.f32 %v948, 1.442695
    %v950 = vpow.pop %v949
    %v951 = vsel %vm359, %v950, 0.0
    %952 = vadd.xlane.f32.xlu0 %v951
    %v953 = vpop.xlane.xlu0 %952
    %v954 = vrcp.pop %v953
    %v955 = vmul.f32 %v950, %v954
    %v956 = vpack.c.bf16 %v955, %v955
    %957 = vrot.lane.b32.xlu0 %v895, 64
    %v958 = vpop.permute.xlu0 %957
    %v960 = vsel %vm359, %v956, 0
    %v963 = vsel %vm377, %v958, 0
    %965 = vmatprep.subr.bf16.mxu0 0
    %966 = vmatpush1.bf16.msra.mxu0 0
    %967 = vmatprep.subr.bf16.mxu0 0
    %968 = vmatpush1.bf16.msra.mxu0 0
    %969 = vmatprep.subr.bf16.mxu0 0
    %970 = vmatpush1.bf16.msra.mxu0 0
    %971 = vmatprep.subr.bf16.mxu0 0
    %972 = vmatpush1.bf16.msra.mxu0 0
    %973 = vmatprep.subr.bf16.mxu0 0
    %974 = vmatpush1.bf16.msra.mxu0 0
    %975 = vmatprep.subr.bf16.mxu0 0
    %976 = vmatpush1.bf16.msra.mxu0 0
    %977 = vmatprep.subr.bf16.mxu0 0
    %978 = vmatpush1.bf16.msra.mxu0 0
    %979 = vmatprep.subr.bf16.mxu0 0
    %980 = vmatpush1.bf16.msra.mxu0 %v963
    %981 = vmatprep.subr.bf16.mxu0 0
    %982 = vmatpush2.bf16.msra.mxu0 0
    %983 = vmatprep.subr.bf16.mxu0 0
    %984 = vmatpush2.bf16.msra.mxu0 0
    %985 = vmatprep.subr.bf16.mxu0 0
    %986 = vmatpush2.bf16.msra.mxu0 0
    %987 = vmatprep.subr.bf16.mxu0 0
    %988 = vmatpush2.bf16.msra.mxu0 0
    %989 = vmatprep.subr.bf16.mxu0 0
    %990 = vmatpush2.bf16.msra.mxu0 0
    %991 = vmatprep.subr.bf16.mxu0 0
    %992 = vmatpush2.bf16.msra.mxu0 0
    %993 = vmatprep.subr.bf16.mxu0 0
    %994 = vmatpush2.bf16.msra.mxu0 0
    %995 = vmatprep.subr.bf16.mxu0 0
    %996 = vmatpush2.bf16.msra.mxu0 0
    %997 = vmatprep.mubr.bf16.mxu0 0
    %998 = vmatmul.mubr.bf16.gmra.mxu0 %v960
    %v999 = vpop.f32.mrf.mxu0
    %v1000 = vadd.f32 0.0, %v999
    %v1001 = vpop.f32.mrf.mxu0
    %v1002 = vpop.f32.mrf.mxu0
    %v1003 = vpop.f32.mrf.mxu0
    %1004 = vdwg.mxu0
    %1005 = vrot.lane.b32.xlu0 %v895, 112
    %v1006 = vpop.permute.xlu0 %1005
    %1007 = vrot.lane.b32.xlu0 %v895, 80
    %v1008 = vpop.permute.xlu0 %1007
    %v1010 = vsel %vm312, %v1006, 0
    %v1013 = vsel %vm312, %v1008, 0
    %1015 = vmatprep.subr.bf16.mxu0 0
    %1016 = vmatpush1.bf16.xpose.msra.mxu0 0
    %1017 = vmatprep.subr.bf16.mxu0 0
    %1018 = vmatpush1.bf16.xpose.msra.mxu0 0
    %1019 = vmatprep.subr.bf16.mxu0 0
    %1020 = vmatpush1.bf16.xpose.msra.mxu0 0
    %1021 = vmatprep.subr.bf16.mxu0 0
    %1022 = vmatpush1.bf16.xpose.msra.mxu0 0
    %1023 = vmatprep.subr.bf16.mxu0 0
    %1024 = vmatpush1.bf16.xpose.msra.mxu0 0
    %1025 = vmatprep.subr.bf16.mxu0 0
    %1026 = vmatpush1.bf16.xpose.msra.mxu0 0
    %1027 = vmatprep.subr.bf16.mxu0 0
    %1028 = vmatpush1.bf16.xpose.msra.mxu0 0
    %1029 = vmatprep.subr.bf16.mxu0 0
    %1030 = vmatpush1.bf16.xpose.msra.mxu0 %v1013
    %1031 = vmatprep.subr.bf16.mxu0 0
    %1032 = vmatpush2.bf16.xpose.msra.mxu0 0
    %1033 = vmatprep.subr.bf16.mxu0 0
    %1034 = vmatpush2.bf16.xpose.msra.mxu0 0
    %1035 = vmatprep.subr.bf16.mxu0 0
    %1036 = vmatpush2.bf16.xpose.msra.mxu0 0
    %1037 = vmatprep.subr.bf16.mxu0 0
    %1038 = vmatpush2.bf16.xpose.msra.mxu0 0
    %1039 = vmatprep.subr.bf16.mxu0 0
    %1040 = vmatpush2.bf16.xpose.msra.mxu0 0
    %1041 = vmatprep.subr.bf16.mxu0 0
    %1042 = vmatpush2.bf16.xpose.msra.mxu0 0
    %1043 = vmatprep.subr.bf16.mxu0 0
    %1044 = vmatpush2.bf16.xpose.msra.mxu0 0
    %1045 = vmatprep.subr.bf16.mxu0 0
    %1046 = vmatpush2.bf16.xpose.msra.mxu0 0
    %1047 = vmatprep.mubr.bf16.mxu0 0
    %1048 = vmatmul.mubr.bf16.gmra.mxu0 %v1010
    %v1049 = vpop.f32.mrf.mxu0
    %v1050 = vadd.f32 %v61, %v1049
    %v1051 = vpop.f32.mrf.mxu0
    %v1052 = vpop.f32.mrf.mxu0
    %v1053 = vpop.f32.mrf.mxu0
    %1054 = vdwg.mxu0
    %v1055 = vsel %vm359, %v1050, -inf
    %1056 = vmax.xlane.f32.xlu0 %v1055
    %v1057 = vpop.xlane.xlu0 %1056
    %v1058 = vsub.f32 %v1050, %v1057
    %v1059 = vmul.f32 %v1058, 1.442695
    %v1060 = vpow.pop %v1059
    %v1061 = vsel %vm359, %v1060, 0.0
    %1062 = vadd.xlane.f32.xlu0 %v1061
    %v1063 = vpop.xlane.xlu0 %1062
    %v1064 = vrcp.pop %v1063
    %v1065 = vmul.f32 %v1060, %v1064
    %v1066 = vpack.c.bf16 %v1065, %v1065
    %1067 = vrot.lane.b32.xlu0 %v895, 48
    %v1068 = vpop.permute.xlu0 %1067
    %v1070 = vsel %vm359, %v1066, 0
    %v1073 = vsel %vm377, %v1068, 0
    %1075 = vmatprep.subr.bf16.mxu0 0
    %1076 = vmatpush1.bf16.msra.mxu0 0
    %1077 = vmatprep.subr.bf16.mxu0 0
    %1078 = vmatpush1.bf16.msra.mxu0 0
    %1079 = vmatprep.subr.bf16.mxu0 0
    %1080 = vmatpush1.bf16.msra.mxu0 0
    %1081 = vmatprep.subr.bf16.mxu0 0
    %1082 = vmatpush1.bf16.msra.mxu0 0
    %1083 = vmatprep.subr.bf16.mxu0 0
    %1084 = vmatpush1.bf16.msra.mxu0 0
    %1085 = vmatprep.subr.bf16.mxu0 0
    %1086 = vmatpush1.bf16.msra.mxu0 0
    %1087 = vmatprep.subr.bf16.mxu0 0
    %1088 = vmatpush1.bf16.msra.mxu0 0
    %1089 = vmatprep.subr.bf16.mxu0 0
    %1090 = vmatpush1.bf16.msra.mxu0 %v1073
    %1091 = vmatprep.subr.bf16.mxu0 0
    %1092 = vmatpush2.bf16.msra.mxu0 0
    %1093 = vmatprep.subr.bf16.mxu0 0
    %1094 = vmatpush2.bf16.msra.mxu0 0
    %1095 = vmatprep.subr.bf16.mxu0 0
    %1096 = vmatpush2.bf16.msra.mxu0 0
    %1097 = vmatprep.subr.bf16.mxu0 0
    %1098 = vmatpush2.bf16.msra.mxu0 0
    %1099 = vmatprep.subr.bf16.mxu0 0
    %1100 = vmatpush2.bf16.msra.mxu0 0
    %1101 = vmatprep.subr.bf16.mxu0 0
    %1102 = vmatpush2.bf16.msra.mxu0 0
    %1103 = vmatprep.subr.bf16.mxu0 0
    %1104 = vmatpush2.bf16.msra.mxu0 0
    %1105 = vmatprep.subr.bf16.mxu0 0
    %1106 = vmatpush2.bf16.msra.mxu0 0
    %1107 = vmatprep.mubr.bf16.mxu0 0
    %1108 = vmatmul.mubr.bf16.gmra.mxu0 %v1070
    %v1109 = vpop.f32.mrf.mxu0
    %v1110 = vadd.f32 0.0, %v1109
    %v1111 = vpop.f32.mrf.mxu0
    %v1112 = vpop.f32.mrf.mxu0
    %v1113 = vpop.f32.mrf.mxu0
    %1114 = vdwg.mxu0
    %1116 = vrot.lane.b32.xlu0 %v1110, 16
    %v1117 = vpop.permute.xlu0 %1116
    %v1119 = vsel %vm312, %v1000, %v1117
    %v1120 = vpack.c.bf16 %v1119, %v1119
    %s1121 = scalar_lea.vmem %s8, 16
    %v1122 = vld [vmem:[%s1121] sm:$0xf]
    %v1123 = vld [vmem:[%s1121 + $0x4] sm:$0xf]
    %v1124 = vld [vmem:[%s1121 + $0x8] sm:$0xf]
    %v1125 = vld [vmem:[%s1121 + $0xc] sm:$0xf]
    %v1130 = vunpack.c.l.b16 %v1122
    %v1131 = vunpack.c.l.b16 %v1123
    %v1132 = vunpack.c.l.b16 %v1124
    %v1133 = vunpack.c.l.b16 %v1125
    %v1134 = vpack.c.b16 %v1131, %v1130
    %v1135 = vpack.c.b16 %v1133, %v1132
    %v1139 = vsel %vm212, %v1120, 0
    %1141 = vmatprep.subr.bf16.mxu0 0
    %1142 = vmatpush1.bf16.msra.mxu0 0
    %1143 = vmatprep.subr.bf16.mxu0 0
    %1144 = vmatpush1.bf16.msra.mxu0 0
    %1145 = vmatprep.subr.bf16.mxu0 0
    %1146 = vmatpush1.bf16.msra.mxu0 0
    %1147 = vmatprep.subr.bf16.mxu0 0
    %1148 = vmatpush1.bf16.msra.mxu0 0
    %1149 = vmatprep.subr.bf16.mxu0 0
    %1150 = vmatpush1.bf16.msra.mxu0 0
    %1151 = vmatprep.subr.bf16.mxu0 0
    %1152 = vmatpush1.bf16.msra.mxu0 0
    %1153 = vmatprep.subr.bf16.mxu0 0
    %1154 = vmatpush1.bf16.msra.mxu0 %v1135
    %1155 = vmatprep.subr.bf16.mxu0 0
    %1156 = vmatpush1.bf16.msra.mxu0 %v1134
    %1157 = vmatprep.subr.bf16.mxu0 0
    %1158 = vmatpush2.bf16.msra.mxu0 0
    %1159 = vmatprep.subr.bf16.mxu0 0
    %1160 = vmatpush2.bf16.msra.mxu0 0
    %1161 = vmatprep.subr.bf16.mxu0 0
    %1162 = vmatpush2.bf16.msra.mxu0 0
    %1163 = vmatprep.subr.bf16.mxu0 0
    %1164 = vmatpush2.bf16.msra.mxu0 0
    %1165 = vmatprep.subr.bf16.mxu0 0
    %1166 = vmatpush2.bf16.msra.mxu0 0
    %1167 = vmatprep.subr.bf16.mxu0 0
    %1168 = vmatpush2.bf16.msra.mxu0 0
    %1169 = vmatprep.subr.bf16.mxu0 0
    %1170 = vmatpush2.bf16.msra.mxu0 0
    %1171 = vmatprep.subr.bf16.mxu0 0
    %1172 = vmatpush2.bf16.msra.mxu0 0
    %1173 = vmatprep.mubr.bf16.mxu0 0
    %1174 = vmatmul.mubr.bf16.gmra.mxu0 %v1139
    %v1175 = vpop.f32.mrf.mxu0
    %v1176 = vadd.f32 0.0, %v1175
    %v1177 = vpop.f32.mrf.mxu0
    %v1178 = vpop.f32.mrf.mxu0
    %v1179 = vpop.f32.mrf.mxu0
    %1180 = vdwg.mxu0
    %v1181 = vadd.f32 %v794, %v1176
    %s1182 = scalar_lea.vmem %s9, 1
    %v1183 = vld [vmem:[%s1182] sm:$0x1]
    %v1185 = vlaneseq
    %v1186 = vshrl.u32 %v1185, 7
    %v1187 = vsub.s32 0, %v1186
    %v1188 = vrot.slane %v1183, %v1187
    %v1190 = vadd.f32 %v1181, %v1188
    %s1191 = scalar_lea.vmem %s10, 1
    %v1192 = vld [vmem:[%s1191] sm:$0x1]
    %s1193 = scalar_lea.vmem %s11, 1
    %v1194 = vld [vmem:[%s1193] sm:$0x1]
    %v1195 = vsel %vm212, %v1190, 0.0
    %1196 = vadd.xlane.f32.xlu0 %v1195
    %v1197 = vpop.xlane.xlu0 %1196
    %v1198 = vmul.f32 %v1197, %v216
    %v1199 = vsub.f32 %v1190, %v1198
    %v1200 = vmul.f32 %v1199, %v1199
    %v1201 = vsel %vm212, %v1200, 0.0
    %1202 = vadd.xlane.f32.xlu0 %v1201
    %v1203 = vpop.xlane.xlu0 %1202
    %v1204 = vmul.f32 %v1203, %v216
    %v1205 = vadd.f32 %v1204, 1e-06
    %v1206 = vrsqrt.pop %v1205
    %v1207 = vmul.f32 %v1199, %v1206
    %v1209 = vlaneseq
    %v1210 = vshrl.u32 %v1209, 7
    %v1211 = vsub.s32 0, %v1210
    %v1212 = vrot.slane %v1192, %v1211
    %v1214 = vmul.f32 %v1207, %v1212
    %v1216 = vlaneseq
    %v1217 = vshrl.u32 %v1216, 7
    %v1218 = vsub.s32 0, %v1217
    %v1219 = vrot.slane %v1194, %v1218
    %v1221 = vadd.f32 %v1214, %v1219
    %v1222 = vpack.c.bf16 %v1221, %v1221
    %s1223 = scalar_lea.vmem %s12, 16
    %v1224 = vld [vmem:[%s1223] sm:$0xf]
    %v1225 = vld [vmem:[%s1223 + $0x4] sm:$0xf]
    %v1226 = vld [vmem:[%s1223 + $0x8] sm:$0xf]
    %v1227 = vld [vmem:[%s1223 + $0xc] sm:$0xf]
    %s1228 = scalar_lea.vmem %s13, 1
    %v1229 = vld [vmem:[%s1228] sm:$0x1]
    %v1231 = vlaneseq
    %v1232 = vshrl.u32 %v1231, 7
    %v1233 = vsub.s32 0, %v1232
    %v1234 = vrot.slane %v1229, %v1233
    %v1240 = vunpack.c.l.b16 %v1224
    %v1241 = vunpack.c.l.b16 %v1225
    %v1242 = vunpack.c.l.b16 %v1226
    %v1243 = vunpack.c.l.b16 %v1227
    %v1244 = vpack.c.b16 %v1241, %v1240
    %v1245 = vpack.c.b16 %v1243, %v1242
    %v1249 = vsel %vm212, %v1222, 0
    %1251 = vmatprep.subr.bf16.mxu0 0
    %1252 = vmatpush1.bf16.msra.mxu0 0
    %1253 = vmatprep.subr.bf16.mxu0 0
    %1254 = vmatpush1.bf16.msra.mxu0 0
    %1255 = vmatprep.subr.bf16.mxu0 0
    %1256 = vmatpush1.bf16.msra.mxu0 0
    %1257 = vmatprep.subr.bf16.mxu0 0
    %1258 = vmatpush1.bf16.msra.mxu0 0
    %1259 = vmatprep.subr.bf16.mxu0 0
    %1260 = vmatpush1.bf16.msra.mxu0 0
    %1261 = vmatprep.subr.bf16.mxu0 0
    %1262 = vmatpush1.bf16.msra.mxu0 0
    %1263 = vmatprep.subr.bf16.mxu0 0
    %1264 = vmatpush1.bf16.msra.mxu0 %v1245
    %1265 = vmatprep.subr.bf16.mxu0 0
    %1266 = vmatpush1.bf16.msra.mxu0 %v1244
    %1267 = vmatprep.subr.bf16.mxu0 0
    %1268 = vmatpush2.bf16.msra.mxu0 0
    %1269 = vmatprep.subr.bf16.mxu0 0
    %1270 = vmatpush2.bf16.msra.mxu0 0
    %1271 = vmatprep.subr.bf16.mxu0 0
    %1272 = vmatpush2.bf16.msra.mxu0 0
    %1273 = vmatprep.subr.bf16.mxu0 0
    %1274 = vmatpush2.bf16.msra.mxu0 0
    %1275 = vmatprep.subr.bf16.mxu0 0
    %1276 = vmatpush2.bf16.msra.mxu0 0
    %1277 = vmatprep.subr.bf16.mxu0 0
    %1278 = vmatpush2.bf16.msra.mxu0 0
    %1279 = vmatprep.subr.bf16.mxu0 0
    %1280 = vmatpush2.bf16.msra.mxu0 0
    %1281 = vmatprep.subr.bf16.mxu0 0
    %1282 = vmatpush2.bf16.msra.mxu0 0
    %1283 = vmatprep.mubr.bf16.mxu0 0
    %1284 = vmatmul.mubr.bf16.gmra.mxu0 %v1249
    %v1285 = vpop.f32.mrf.mxu0
    %v1286 = vadd.f32 %v1234, %v1285
    %v1287 = vpop.f32.mrf.mxu0
    %v1288 = vpop.f32.mrf.mxu0
    %v1289 = vpop.f32.mrf.mxu0
    %1290 = vdwg.mxu0
    %v1291 = vmul.f32 %v1286, 0.5
    %v1292 = vmul.f32 %v1286, 0.044715
    %v1293 = vmul.f32 %v1292, %v1286
    %v1294 = vmul.f32 %v1293, %v1286
    %v1295 = vadd.f32 %v1286, %v1294
    %v1296 = vmul.f32 %v1295, 0.7978846
    %v1297 = vtanh.pop %v1296
    %v1298 = vadd.f32 %v1297, 1.0
    %v1299 = vmul.f32 %v1291, %v1298
    %v1300 = vpack.c.bf16 %v1299, %v1299
    %s1301 = scalar_lea.vmem %s14, 32
    %v1302 = vld [vmem:[%s1301] sm:$0xf]
    %v1303 = vld [vmem:[%s1301 + $0x4] sm:$0xf]
    %v1304 = vld [vmem:[%s1301 + $0x8] sm:$0xf]
    %v1305 = vld [vmem:[%s1301 + $0xc] sm:$0xf]
    %v1306 = vld [vmem:[%s1301 + $0x10] sm:$0xf]
    %v1307 = vld [vmem:[%s1301 + $0x14] sm:$0xf]
    %v1308 = vld [vmem:[%s1301 + $0x18] sm:$0xf]
    %v1309 = vld [vmem:[%s1301 + $0x1c] sm:$0xf]
    %v1318 = vunpack.c.l.b16 %v1302
    %v1319 = vunpack.c.l.b16 %v1303
    %v1320 = vunpack.c.l.b16 %v1304
    %v1321 = vunpack.c.l.b16 %v1305
    %v1322 = vunpack.c.l.b16 %v1306
    %v1323 = vunpack.c.l.b16 %v1307
    %v1324 = vunpack.c.l.b16 %v1308
    %v1325 = vunpack.c.l.b16 %v1309
    %v1326 = vpack.c.b16 %v1319, %v1318
    %v1327 = vpack.c.b16 %v1321, %v1320
    %v1328 = vpack.c.b16 %v1323, %v1322
    %v1329 = vpack.c.b16 %v1325, %v1324
    %v1335 = vsel %vm166, %v1300, 0
    %1337 = vmatprep.subr.bf16.mxu0 0
    %1338 = vmatpush1.bf16.msra.mxu0 0
    %1339 = vmatprep.subr.bf16.mxu0 0
    %1340 = vmatpush1.bf16.msra.mxu0 0
    %1341 = vmatprep.subr.bf16.mxu0 0
    %1342 = vmatpush1.bf16.msra.mxu0 0
    %1343 = vmatprep.subr.bf16.mxu0 0
    %1344 = vmatpush1.bf16.msra.mxu0 0
    %1345 = vmatprep.subr.bf16.mxu0 0
    %1346 = vmatpush1.bf16.msra.mxu0 %v1329
    %1347 = vmatprep.subr.bf16.mxu0 0
    %1348 = vmatpush1.bf16.msra.mxu0 %v1328
    %1349 = vmatprep.subr.bf16.mxu0 0
    %1350 = vmatpush1.bf16.msra.mxu0 %v1327
    %1351 = vmatprep.subr.bf16.mxu0 0
    %1352 = vmatpush1.bf16.msra.mxu0 %v1326
    %1353 = vmatprep.subr.bf16.mxu0 0
    %1354 = vmatpush2.bf16.msra.mxu0 0
    %1355 = vmatprep.subr.bf16.mxu0 0
    %1356 = vmatpush2.bf16.msra.mxu0 0
    %1357 = vmatprep.subr.bf16.mxu0 0
    %1358 = vmatpush2.bf16.msra.mxu0 0
    %1359 = vmatprep.subr.bf16.mxu0 0
    %1360 = vmatpush2.bf16.msra.mxu0 0
    %1361 = vmatprep.subr.bf16.mxu0 0
    %1362 = vmatpush2.bf16.msra.mxu0 0
    %1363 = vmatprep.subr.bf16.mxu0 0
    %1364 = vmatpush2.bf16.msra.mxu0 0
    %1365 = vmatprep.subr.bf16.mxu0 0
    %1366 = vmatpush2.bf16.msra.mxu0 0
    %1367 = vmatprep.subr.bf16.mxu0 0
    %1368 = vmatpush2.bf16.msra.mxu0 0
    %1369 = vmatprep.mubr.bf16.mxu0 0
    %1370 = vmatmul.mubr.bf16.gmra.mxu0 %v1335
    %v1371 = vpop.f32.mrf.mxu0
    %v1372 = vadd.f32 0.0, %v1371
    %v1373 = vpop.f32.mrf.mxu0
    %v1374 = vpop.f32.mrf.mxu0
    %v1375 = vpop.f32.mrf.mxu0
    %1376 = vdwg.mxu0
    %v1377 = vadd.f32 %v1190, %v1372
    %s1378 = scalar_lea.vmem %s15, 1
    %v1379 = vld [vmem:[%s1378] sm:$0x1]
    %v1381 = vlaneseq
    %v1382 = vshrl.u32 %v1381, 7
    %v1383 = vsub.s32 0, %v1382
    %v1384 = vrot.slane %v1379, %v1383
    %v1386 = vadd.f32 %v1377, %v1384
    %v1387 = vld [vmem:[%s16] sm:$0x1]
    %v1388 = vld [vmem:[%s17] sm:$0x1]
    %v1389 = vsel %vm212, %v1386, 0.0
    %1390 = vadd.xlane.f32.xlu0 %v1389
    %v1391 = vpop.xlane.xlu0 %1390
    %v1392 = vmul.f32 %v1391, %v216
    %v1393 = vsub.f32 %v1386, %v1392
    %v1394 = vmul.f32 %v1393, %v1393
    %v1395 = vsel %vm212, %v1394, 0.0
    %1396 = vadd.xlane.f32.xlu0 %v1395
    %v1397 = vpop.xlane.xlu0 %1396
    %v1398 = vmul.f32 %v1397, %v216
    %v1399 = vadd.f32 %v1398, 1e-06
    %v1400 = vrsqrt.pop %v1399
    %v1401 = vmul.f32 %v1393, %v1400
    %v1403 = vlaneseq
    %v1404 = vshrl.u32 %v1403, 7
    %v1405 = vsub.s32 0, %v1404
    %v1406 = vrot.slane %v1387, %v1405
    %v1408 = vmul.f32 %v1401, %v1406
    %v1410 = vlaneseq
    %v1411 = vshrl.u32 %v1410, 7
    %v1412 = vsub.s32 0, %v1411
    %v1413 = vrot.slane %v1388, %v1412
    %v1415 = vadd.f32 %v1408, %v1413
    %1416 = vst.msk [vmem:[#allocation2] sm:$0xff] %vm212, %v1415
    // Predicated region
    $region74: #{siglip_vit_forward.1} parent=1 // pred_check
      _
    $region75: #{siglip_vit_forward.1} parent=1 // pred_check_branch
      %1418 = sbr.rel (0) target = $region77
    $region76: #{siglip_vit_forward.1} parent=1 // pred_region
      %s1420 = ssub.s32 128, 128
      %1421 = vsyncadd [#allocation3], %s1420
      %s1423 = sshll.u32 [#allocation2], 4
      %s1424 = int_to_ptr.vmem [resolvable:$true] %s1423
      %1426 = dma.vmem_to_hbm [thread:$0]  %s1424, 128, %s18, [#allocation3]
    $region77: #{siglip_vit_forward.1} parent=1 // pred_fallthru
      _
    // Predicated region
    $region78: #{siglip_vit_forward.1} parent=1 // pred_check
      _
    $region79: #{siglip_vit_forward.1} parent=1 // pred_check_branch
      %1428 = sbr.rel (0) target = $region81
    $region80: #{siglip_vit_forward.1} parent=1 // pred_region
      %1429 = dma.done [#allocation3], 128
    $region81: #{siglip_vit_forward.1} parent=1 // pred_fallthru
      _
    %1430 = vsyncpa [#allocation3], 1

</llo_original>
